<compile_context>
chip_gen: v6e
topology: v6e:2x2x1
jax: 0.10.0
libtpu: 0.0.40
codegen_flags: <defaults>
</compile_context>

<pallas_src>
import functools
import math

import jax
import jax.numpy as jnp
from jax.experimental import pallas as pl
from jax.experimental.pallas import tpu as pltpu

# ---- small synthetic DistilBERT config ----
VOCAB = 100
MAX_POS = 64
HIDDEN = 32
HEADS = 2
HEAD_DIM = HIDDEN // HEADS
FFN = 64
LAYERS = 2
NUM_LABELS = 2
LN_EPS = 1e-12
BATCH = 2
SEQ = 8

VMEM_SPEC = pl.BlockSpec(memory_space=pltpu.MemorySpace.VMEM)


# ---------------- single fused forward kernel ----------------
def _fused_forward_kernel(
    emb_ref, mask_ref,
    emb_ln_g_ref, emb_ln_b_ref,
    qkv_w_ref, qkv_b_ref, o_w_ref, o_b_ref,
    ln1_g_ref, ln1_b_ref,
    i_w_ref, i_b_ref, f_w_ref, f_b_ref,
    ln2_g_ref, ln2_b_ref,
    attn_w1_ref, attn_b1_ref, attn_w2_ref, attn_b2_ref,
    cls_w_ref, cls_b_ref,
    logits_ref,
    *, batch, seq,
):
    scale = 1.0 / math.sqrt(HEAD_DIM)
    inv_sqrt2 = 1.0 / math.sqrt(2.0)

    def ln(x, g, b):
        mean = jnp.mean(x, axis=-1, keepdims=True)
        var = jnp.mean(jnp.square(x - mean), axis=-1, keepdims=True)
        return (x - mean) * jax.lax.rsqrt(var + LN_EPS) * g + b

    def bf16(x):
        return x.astype(jnp.bfloat16)

    # Combined additive mask for the head-major block-diagonal score layout:
    # (B*HEADS*S, B*HEADS*S); off-block entries are ~-inf, on-block entries
    # carry the HF-style -1e4 key mask.  Precomputed outside the kernel.
    mask = mask_ref[...]

    def to_head_major(t):          # (B*S, HIDDEN) -> (B*HEADS*S, HEAD_DIM)
        parts = []
        for b in range(batch):
            for hd in range(HEADS):
                parts.append(t[b * seq:(b + 1) * seq,
                               hd * HEAD_DIM:(hd + 1) * HEAD_DIM])
        return jnp.concatenate(parts, axis=0)

    def from_head_major(t):        # (B*HEADS*S, HEAD_DIM) -> (B*S, HIDDEN)
        rows = []
        for b in range(batch):
            heads = [t[(b * HEADS + hd) * seq:(b * HEADS + hd + 1) * seq, :]
                     for hd in range(HEADS)]
            rows.append(jnp.concatenate(heads, axis=1))
        return jnp.concatenate(rows, axis=0)

    # embeddings: word + position were summed outside; LayerNorm here.
    h = ln(emb_ref[...].astype(jnp.float32), emb_ln_g_ref[...], emb_ln_b_ref[...])

    for l in range(LAYERS):        # static unroll, LAYERS is tiny
        x = h

        # fused Q/K/V projection: one (B*S, 3H) matmul, sliced in-register.
        qkv = (jnp.dot(bf16(x), qkv_w_ref[l], preferred_element_type=jnp.float32)
               + qkv_b_ref[l])
        q = qkv[:, 0 * HIDDEN:1 * HIDDEN]
        k = qkv[:, 1 * HIDDEN:2 * HIDDEN]
        v = qkv[:, 2 * HIDDEN:3 * HIDDEN]

        # multi-head self-attention batched over (batch, head):
        # head-major repack -> one block-diagonal score matmul -> one softmax
        # -> one PV matmul.  Everything stays in vregs (no scratch stores).
        q_hm = to_head_major(q)
        k_hm = to_head_major(k)
        v_hm = to_head_major(v)

        s = jax.lax.dot_general(
            bf16(q_hm), bf16(k_hm), (((1,), (1,)), ((), ())),
            preferred_element_type=jnp.float32) * scale        # (G*S, G*S)
        s = s + mask
        s = s - jnp.max(s, axis=-1, keepdims=True)
        p = jnp.exp(s)
        p = p * pl.reciprocal(jnp.sum(p, axis=-1, keepdims=True), approx=True)

        ctx_hm = jnp.dot(bf16(p), bf16(v_hm),
                         preferred_element_type=jnp.float32)   # (G*S, HEAD_DIM)
        ctx = from_head_major(ctx_hm)                          # (B*S, HIDDEN)

        attn_out = (jnp.dot(bf16(ctx), o_w_ref[l],
                            preferred_element_type=jnp.float32) + o_b_ref[l])
        h1 = ln(attn_out + x, ln1_g_ref[l], ln1_b_ref[l])      # sa_layer_norm

        ff = (jnp.dot(bf16(h1), i_w_ref[l], preferred_element_type=jnp.float32)
              + i_b_ref[l])
        # exact GELU; the 0.5 prefactor is folded into f_w at init.
        g = ff * (1.0 + jax.lax.erf(ff * inv_sqrt2))
        ff_out = (jnp.dot(bf16(g), f_w_ref[l], preferred_element_type=jnp.float32)
                  + f_b_ref[l])
        h = ln(ff_out + h1, ln2_g_ref[l], ln2_b_ref[l])        # output_layer_norm

    # fused attention-pooling head + classifier.
    # NOTE: matching the reference, the pooling softmax is NOT masked by
    # attention_mask (torch.softmax over all positions).
    a = jnp.tanh(jnp.dot(bf16(h), attn_w1_ref[...],
                         preferred_element_type=jnp.float32) + attn_b1_ref[...])
    scores = (jnp.dot(bf16(a), attn_w2_ref[...],
                      preferred_element_type=jnp.float32) + attn_b2_ref[...])  # (B*S, 1)

    # per-batch softmax over positions, weighted sum as an MXU contraction,
    # pooled rows assembled into one (B, HIDDEN) value (one-hot selects avoid
    # tiny 1-sublane concatenations / per-row masked stores).
    pooled = jnp.zeros((batch, HIDDEN), jnp.float32)
    row_ids = jax.lax.broadcasted_iota(jnp.int32, (batch, 1), 0)
    for b in range(batch):
        sc = scores[b * seq:(b + 1) * seq, :]                  # (S, 1)
        sc = sc - jnp.max(sc, axis=0, keepdims=True)
        wgt = jnp.exp(sc)
        wgt = wgt * pl.reciprocal(jnp.sum(wgt, axis=0, keepdims=True), approx=True)
        pooled_b = jax.lax.dot_general(
            bf16(wgt), bf16(h[b * seq:(b + 1) * seq, :]),
            (((0,), (0,)), ((), ())),
            preferred_element_type=jnp.float32)                # (1, HIDDEN)
        pooled = pooled + jnp.where(row_ids == b, pooled_b, 0.0)

    # dropout: identity at inference time
    logits = (jnp.dot(bf16(pooled), cls_w_ref[...],
                      preferred_element_type=jnp.float32) + cls_b_ref[...])
    logits_ref[...] = logits.astype(logits_ref.dtype)          # single store


# ---------------- parameters (deterministic synthetic init, fused layout) ----------------
def init_params(key):
    keys = iter(jax.random.split(key, 64))

    def w(shape, scale=0.02):
        return (scale * jax.random.normal(next(keys), shape)).astype(jnp.float32)

    z = lambda *s: jnp.zeros(s, jnp.float32)
    o = lambda *s: jnp.ones(s, jnp.float32)
    bf = lambda t: t.astype(jnp.bfloat16)

    stacked = dict(qkv_w=[], qkv_b=[], o_w=[], o_b=[], ln1_g=[], ln1_b=[],
                   i_w=[], i_b=[], f_w=[], f_b=[], ln2_g=[], ln2_b=[])
    for _ in range(LAYERS):
        q_w, k_w, v_w = w((HIDDEN, HIDDEN)), w((HIDDEN, HIDDEN)), w((HIDDEN, HIDDEN))
        stacked["qkv_w"].append(jnp.concatenate([q_w, k_w, v_w], axis=1))  # (H, 3H)
        stacked["qkv_b"].append(z(1, 3 * HIDDEN))
        stacked["o_w"].append(w((HIDDEN, HIDDEN)))
        stacked["o_b"].append(z(1, HIDDEN))
        stacked["ln1_g"].append(o(1, HIDDEN)); stacked["ln1_b"].append(z(1, HIDDEN))
        stacked["i_w"].append(w((HIDDEN, FFN))); stacked["i_b"].append(z(1, FFN))
        # fold GELU's 0.5 prefactor into the FFN output weight (linear, exact)
        stacked["f_w"].append(0.5 * w((FFN, HIDDEN))); stacked["f_b"].append(z(1, HIDDEN))
        stacked["ln2_g"].append(o(1, HIDDEN)); stacked["ln2_b"].append(z(1, HIDDEN))

    params = {
        "word_emb": w((VOCAB, HIDDEN)),
        "pos_emb": w((MAX_POS, HIDDEN)),
        "emb_ln_g": o(1, HIDDEN), "emb_ln_b": z(1, HIDDEN),
        "attn_w1": bf(w((HIDDEN, HIDDEN))), "attn_b1": z(1, HIDDEN),
        "attn_w2": bf(w((HIDDEN, 1))), "attn_b2": z(1, 1),
        "cls_w": bf(w((HIDDEN, NUM_LABELS))), "cls_b": z(1, NUM_LABELS),
    }
    bf16_stacks = {"qkv_w", "o_w", "i_w", "f_w"}   # matmul weights -> bf16 MXU operands
    for name, vals in stacked.items():
        arr = jnp.stack(vals, axis=0)              # leading LAYERS axis
        params[name] = bf(arr) if name in bf16_stacks else arr
    return params


# ---------------- forward pass (matches DistilBertClassifier.forward semantics) ----------------
def distilbert_classifier_forward(params, input_ids, attention_mask):
    B, S = input_ids.shape
    N = B * HEADS * S

    # embeddings (plain-JAX gather): word + position; LayerNorm happens in-kernel.
    emb = (jnp.take(params["word_emb"], input_ids, axis=0)
           + params["pos_emb"][None, :S, :]).reshape(B * S, HIDDEN).astype(jnp.float32)

    # Combined additive mask for the head-major block-diagonal score layout:
    # rows/cols are (batch, head, position) flattened.  On-block entries carry
    # the HF-style -1e4 key mask; off-block entries get -1e9 so a single
    # 32-lane softmax handles every (batch, head) at once.
    idx = jnp.arange(N)
    grp = idx // S                    # (batch, head) group per row/col
    col_batch = grp // HEADS
    col_pos = idx % S
    key_bias = (1.0 - attention_mask.astype(jnp.float32)[col_batch, col_pos]) * -10000.0
    mask = jnp.where(grp[:, None] == grp[None, :], key_bias[None, :],
                     jnp.float32(-1e9))                        # (N, N)

    logits = pl.pallas_call(
        functools.partial(_fused_forward_kernel, batch=B, seq=S),
        out_shape=jax.ShapeDtypeStruct((B, NUM_LABELS), jnp.float32),
        in_specs=[VMEM_SPEC] * 22,
        out_specs=VMEM_SPEC,
    )(emb, mask,
      params["emb_ln_g"], params["emb_ln_b"],
      params["qkv_w"], params["qkv_b"], params["o_w"], params["o_b"],
      params["ln1_g"], params["ln1_b"],
      params["i_w"], params["i_b"], params["f_w"], params["f_b"],
      params["ln2_g"], params["ln2_b"],
      params["attn_w1"], params["attn_b1"], params["attn_w2"], params["attn_b2"],
      params["cls_w"], params["cls_b"])

    # TODO(synk): DistilBertModel returns attentions=None unless output_attentions=True; mirror that.
    return logits, None


if __name__ == "__main__":
    key = jax.random.PRNGKey(0)
    pkey, dkey = jax.random.split(key)
    params = init_params(pkey)

    input_ids = jax.random.randint(dkey, (BATCH, SEQ), 0, VOCAB, dtype=jnp.int32)
    attention_mask = jnp.array(
        [[1] * SEQ,
         [1] * (SEQ - 3) + [0] * 3], dtype=jnp.int32)

    logits, attentions = distilbert_classifier_forward(params, input_ids, attention_mask)
    logits = jax.block_until_ready(logits)
    assert logits.shape == (BATCH, NUM_LABELS)
    assert attentions is None
    assert bool(jnp.all(jnp.isfinite(logits)))
    print("KERNEL_OK")
</pallas_src>

<mosaic_0001>
module attributes {stable_mosaic.version = 11 : i64} {
  func.func @_fused_forward_kernel(%arg0: memref<16x32xf32, #tpu.memory_space<vmem>>, %arg1: memref<32x32xf32, #tpu.memory_space<vmem>>, %arg2: memref<1x32xf32, #tpu.memory_space<vmem>>, %arg3: memref<1x32xf32, #tpu.memory_space<vmem>>, %arg4: memref<2x32x96xbf16, #tpu.memory_space<vmem>>, %arg5: memref<2x1x96xf32, #tpu.memory_space<vmem>>, %arg6: memref<2x32x32xbf16, #tpu.memory_space<vmem>>, %arg7: memref<2x1x32xf32, #tpu.memory_space<vmem>>, %arg8: memref<2x1x32xf32, #tpu.memory_space<vmem>>, %arg9: memref<2x1x32xf32, #tpu.memory_space<vmem>>, %arg10: memref<2x32x64xbf16, #tpu.memory_space<vmem>>, %arg11: memref<2x1x64xf32, #tpu.memory_space<vmem>>, %arg12: memref<2x64x32xbf16, #tpu.memory_space<vmem>>, %arg13: memref<2x1x32xf32, #tpu.memory_space<vmem>>, %arg14: memref<2x1x32xf32, #tpu.memory_space<vmem>>, %arg15: memref<2x1x32xf32, #tpu.memory_space<vmem>>, %arg16: memref<32x32xbf16, #tpu.memory_space<vmem>>, %arg17: memref<1x32xf32, #tpu.memory_space<vmem>>, %arg18: memref<32x1xbf16, #tpu.memory_space<vmem>>, %arg19: memref<1x1xf32, #tpu.memory_space<vmem>>, %arg20: memref<32x2xbf16, #tpu.memory_space<vmem>>, %arg21: memref<1x2xf32, #tpu.memory_space<vmem>>, %arg22: memref<2x2xf32, #tpu.memory_space<vmem>>) attributes {dimension_semantics = [], scalar_prefetch = 0 : i64, scratch_operands = 0 : i64, tpu.core_type = #tpu.core_type<tc>} {
    %c0 = arith.constant 0 : index
    %c0_0 = arith.constant 0 : index
    %0 = vector.load %arg1[%c0, %c0_0] : memref<32x32xf32, #tpu.memory_space<vmem>>, vector<32x32xf32>
    %c0_1 = arith.constant 0 : index
    %c0_2 = arith.constant 0 : index
    %1 = vector.load %arg0[%c0_1, %c0_2] : memref<16x32xf32, #tpu.memory_space<vmem>>, vector<16x32xf32>
    %c0_3 = arith.constant 0 : index
    %c0_4 = arith.constant 0 : index
    %2 = vector.load %arg2[%c0_3, %c0_4] : memref<1x32xf32, #tpu.memory_space<vmem>>, vector<1x32xf32>
    %c0_5 = arith.constant 0 : index
    %c0_6 = arith.constant 0 : index
    %3 = vector.load %arg3[%c0_5, %c0_6] : memref<1x32xf32, #tpu.memory_space<vmem>>, vector<1x32xf32>
    %cst = arith.constant dense<0.000000e+00> : vector<16xf32>
    %4 = vector.multi_reduction <add>, %1, %cst [1] : vector<16x32xf32> to vector<16xf32>
    %5 = vector.shape_cast %4 : vector<16xf32> to vector<16x1xf32>
    %cst_7 = arith.constant 3.200000e+01 : f32
    %6 = vector.broadcast %cst_7 : f32 to vector<16x1xf32>
    %7 = arith.divf %5, %6 : vector<16x1xf32>
    %8 = vector.broadcast %7 : vector<16x1xf32> to vector<16x32xf32>
    %9 = arith.subf %1, %8 : vector<16x32xf32>
    %10 = arith.mulf %9, %9 : vector<16x32xf32>
    %cst_8 = arith.constant dense<0.000000e+00> : vector<16xf32>
    %11 = vector.multi_reduction <add>, %10, %cst_8 [1] : vector<16x32xf32> to vector<16xf32>
    %12 = vector.shape_cast %11 : vector<16xf32> to vector<16x1xf32>
    %cst_9 = arith.constant 3.200000e+01 : f32
    %13 = vector.broadcast %cst_9 : f32 to vector<16x1xf32>
    %14 = arith.divf %12, %13 : vector<16x1xf32>
    %15 = vector.broadcast %7 : vector<16x1xf32> to vector<16x32xf32>
    %16 = arith.subf %1, %15 : vector<16x32xf32>
    %cst_10 = arith.constant 9.99999996E-13 : f32
    %17 = vector.broadcast %cst_10 : f32 to vector<16x1xf32>
    %18 = arith.addf %14, %17 : vector<16x1xf32>
    %19 = math.rsqrt %18 : vector<16x1xf32>
    %20 = vector.broadcast %19 : vector<16x1xf32> to vector<16x32xf32>
    %21 = arith.mulf %16, %20 : vector<16x32xf32>
    %22 = vector.broadcast %2 : vector<1x32xf32> to vector<16x32xf32>
    %23 = arith.mulf %21, %22 : vector<16x32xf32>
    %24 = vector.broadcast %3 : vector<1x32xf32> to vector<16x32xf32>
    %25 = arith.addf %23, %24 : vector<16x32xf32>
    %26 = arith.truncf %25 : vector<16x32xf32> to vector<16x32xbf16>
    %c0_11 = arith.constant 0 : index
    %c0_12 = arith.constant 0 : index
    %c0_13 = arith.constant 0 : index
    %27 = vector.load %arg4[%c0_11, %c0_12, %c0_13] : memref<2x32x96xbf16, #tpu.memory_space<vmem>>, vector<1x32x96xbf16>
    %28 = vector.shape_cast %27 : vector<1x32x96xbf16> to vector<32x96xbf16>
    %cst_14 = arith.constant dense<0.000000e+00> : vector<16x96xf32>
    %29 = tpu.matmul %26, %28, %cst_14 {dimension_numbers = #tpu.dot_dimension_numbers<[1], [0], [0], [1], [0, 0, 1, 1], [], []>} : vector<16x32xbf16>, vector<32x96xbf16>, vector<16x96xf32> -> vector<16x96xf32>
    %c0_15 = arith.constant 0 : index
    %c0_16 = arith.constant 0 : index
    %c0_17 = arith.constant 0 : index
    %30 = vector.load %arg5[%c0_15, %c0_16, %c0_17] : memref<2x1x96xf32, #tpu.memory_space<vmem>>, vector<1x1x96xf32>
    %31 = vector.shape_cast %30 : vector<1x1x96xf32> to vector<1x96xf32>
    %32 = vector.broadcast %31 : vector<1x96xf32> to vector<16x96xf32>
    %33 = arith.addf %29, %32 : vector<16x96xf32>
    %34 = vector.extract_strided_slice %33 {offsets = [0, 0], sizes = [16, 32], strides = [1, 1]} : vector<16x96xf32> to vector<16x32xf32>
    %35 = vector.extract_strided_slice %33 {offsets = [0, 32], sizes = [16, 32], strides = [1, 1]} : vector<16x96xf32> to vector<16x32xf32>
    %36 = vector.extract_strided_slice %33 {offsets = [0, 64], sizes = [16, 32], strides = [1, 1]} : vector<16x96xf32> to vector<16x32xf32>
    %37 = vector.extract_strided_slice %34 {offsets = [0, 0], sizes = [8, 16], strides = [1, 1]} : vector<16x32xf32> to vector<8x16xf32>
    %38 = vector.extract_strided_slice %34 {offsets = [0, 16], sizes = [8, 16], strides = [1, 1]} : vector<16x32xf32> to vector<8x16xf32>
    %39 = vector.extract_strided_slice %34 {offsets = [8, 0], sizes = [8, 16], strides = [1, 1]} : vector<16x32xf32> to vector<8x16xf32>
    %40 = vector.extract_strided_slice %34 {offsets = [8, 16], sizes = [8, 16], strides = [1, 1]} : vector<16x32xf32> to vector<8x16xf32>
    %41 = tpu.concatenate %37, %38, %39, %40 in 0 : vector<8x16xf32>, vector<8x16xf32>, vector<8x16xf32>, vector<8x16xf32> -> vector<32x16xf32>
    %42 = vector.extract_strided_slice %35 {offsets = [0, 0], sizes = [8, 16], strides = [1, 1]} : vector<16x32xf32> to vector<8x16xf32>
    %43 = vector.extract_strided_slice %35 {offsets = [0, 16], sizes = [8, 16], strides = [1, 1]} : vector<16x32xf32> to vector<8x16xf32>
    %44 = vector.extract_strided_slice %35 {offsets = [8, 0], sizes = [8, 16], strides = [1, 1]} : vector<16x32xf32> to vector<8x16xf32>
    %45 = vector.extract_strided_slice %35 {offsets = [8, 16], sizes = [8, 16], strides = [1, 1]} : vector<16x32xf32> to vector<8x16xf32>
    %46 = tpu.concatenate %42, %43, %44, %45 in 0 : vector<8x16xf32>, vector<8x16xf32>, vector<8x16xf32>, vector<8x16xf32> -> vector<32x16xf32>
    %47 = vector.extract_strided_slice %36 {offsets = [0, 0], sizes = [8, 16], strides = [1, 1]} : vector<16x32xf32> to vector<8x16xf32>
    %48 = vector.extract_strided_slice %36 {offsets = [0, 16], sizes = [8, 16], strides = [1, 1]} : vector<16x32xf32> to vector<8x16xf32>
    %49 = vector.extract_strided_slice %36 {offsets = [8, 0], sizes = [8, 16], strides = [1, 1]} : vector<16x32xf32> to vector<8x16xf32>
    %50 = vector.extract_strided_slice %36 {offsets = [8, 16], sizes = [8, 16], strides = [1, 1]} : vector<16x32xf32> to vector<8x16xf32>
    %51 = tpu.concatenate %47, %48, %49, %50 in 0 : vector<8x16xf32>, vector<8x16xf32>, vector<8x16xf32>, vector<8x16xf32> -> vector<32x16xf32>
    %52 = arith.truncf %41 : vector<32x16xf32> to vector<32x16xbf16>
    %53 = arith.truncf %46 : vector<32x16xf32> to vector<32x16xbf16>
    %cst_18 = arith.constant dense<0.000000e+00> : vector<32x32xf32>
    %54 = tpu.matmul %52, %53, %cst_18 {dimension_numbers = #tpu.dot_dimension_numbers<[1], [1], [0], [0], [0, 0, 1, 0], [], []>} : vector<32x16xbf16>, vector<32x16xbf16>, vector<32x32xf32> -> vector<32x32xf32>
    %cst_19 = arith.constant 2.500000e-01 : f32
    %55 = vector.broadcast %cst_19 : f32 to vector<32x32xf32>
    %56 = arith.mulf %54, %55 : vector<32x32xf32>
    %57 = arith.addf %56, %0 : vector<32x32xf32>
    %cst_20 = arith.constant dense<0xFF800000> : vector<32xf32>
    %58 = vector.multi_reduction <maximumf>, %57, %cst_20 [1] : vector<32x32xf32> to vector<32xf32>
    %59 = vector.shape_cast %58 : vector<32xf32> to vector<32x1xf32>
    %60 = vector.broadcast %59 : vector<32x1xf32> to vector<32x32xf32>
    %61 = arith.subf %57, %60 : vector<32x32xf32>
    %62 = math.exp %61 : vector<32x32xf32>
    %cst_21 = arith.constant dense<0.000000e+00> : vector<32xf32>
    %63 = vector.multi_reduction <add>, %62, %cst_21 [1] : vector<32x32xf32> to vector<32xf32>
    %64 = vector.shape_cast %63 : vector<32xf32> to vector<32x1xf32>
    %65 = tpu.reciprocal %64 {approx = true} : vector<32x1xf32> -> vector<32x1xf32>
    %66 = vector.broadcast %65 : vector<32x1xf32> to vector<32x32xf32>
    %67 = arith.mulf %62, %66 : vector<32x32xf32>
    %68 = arith.truncf %67 : vector<32x32xf32> to vector<32x32xbf16>
    %69 = arith.truncf %51 : vector<32x16xf32> to vector<32x16xbf16>
    %cst_22 = arith.constant dense<0.000000e+00> : vector<32x16xf32>
    %70 = tpu.matmul %68, %69, %cst_22 {dimension_numbers = #tpu.dot_dimension_numbers<[1], [0], [0], [1], [0, 0, 1, 1], [], []>} : vector<32x32xbf16>, vector<32x16xbf16>, vector<32x16xf32> -> vector<32x16xf32>
    %71 = vector.extract_strided_slice %70 {offsets = [0, 0], sizes = [8, 16], strides = [1, 1]} : vector<32x16xf32> to vector<8x16xf32>
    %72 = vector.extract_strided_slice %70 {offsets = [8, 0], sizes = [8, 16], strides = [1, 1]} : vector<32x16xf32> to vector<8x16xf32>
    %73 = tpu.concatenate %71, %72 in 1 : vector<8x16xf32>, vector<8x16xf32> -> vector<8x32xf32>
    %74 = vector.extract_strided_slice %70 {offsets = [16, 0], sizes = [8, 16], strides = [1, 1]} : vector<32x16xf32> to vector<8x16xf32>
    %75 = vector.extract_strided_slice %70 {offsets = [24, 0], sizes = [8, 16], strides = [1, 1]} : vector<32x16xf32> to vector<8x16xf32>
    %76 = tpu.concatenate %74, %75 in 1 : vector<8x16xf32>, vector<8x16xf32> -> vector<8x32xf32>
    %77 = tpu.concatenate %73, %76 in 0 : vector<8x32xf32>, vector<8x32xf32> -> vector<16x32xf32>
    %78 = arith.truncf %77 : vector<16x32xf32> to vector<16x32xbf16>
    %c0_23 = arith.constant 0 : index
    %c0_24 = arith.constant 0 : index
    %c0_25 = arith.constant 0 : index
    %79 = vector.load %arg6[%c0_23, %c0_24, %c0_25] : memref<2x32x32xbf16, #tpu.memory_space<vmem>>, vector<1x32x32xbf16>
    %80 = vector.shape_cast %79 : vector<1x32x32xbf16> to vector<32x32xbf16>
    %cst_26 = arith.constant dense<0.000000e+00> : vector<16x32xf32>
    %81 = tpu.matmul %78, %80, %cst_26 {dimension_numbers = #tpu.dot_dimension_numbers<[1], [0], [0], [1], [0, 0, 1, 1], [], []>} : vector<16x32xbf16>, vector<32x32xbf16>, vector<16x32xf32> -> vector<16x32xf32>
    %c0_27 = arith.constant 0 : index
    %c0_28 = arith.constant 0 : index
    %c0_29 = arith.constant 0 : index
    %82 = vector.load %arg7[%c0_27, %c0_28, %c0_29] : memref<2x1x32xf32, #tpu.memory_space<vmem>>, vector<1x1x32xf32>
    %83 = vector.shape_cast %82 : vector<1x1x32xf32> to vector<1x32xf32>
    %84 = vector.broadcast %83 : vector<1x32xf32> to vector<16x32xf32>
    %85 = arith.addf %81, %84 : vector<16x32xf32>
    %86 = arith.addf %85, %25 : vector<16x32xf32>
    %c0_30 = arith.constant 0 : index
    %c0_31 = arith.constant 0 : index
    %c0_32 = arith.constant 0 : index
    %87 = vector.load %arg8[%c0_30, %c0_31, %c0_32] : memref<2x1x32xf32, #tpu.memory_space<vmem>>, vector<1x1x32xf32>
    %88 = vector.shape_cast %87 : vector<1x1x32xf32> to vector<1x32xf32>
    %c0_33 = arith.constant 0 : index
    %c0_34 = arith.constant 0 : index
    %c0_35 = arith.constant 0 : index
    %89 = vector.load %arg9[%c0_33, %c0_34, %c0_35] : memref<2x1x32xf32, #tpu.memory_space<vmem>>, vector<1x1x32xf32>
    %90 = vector.shape_cast %89 : vector<1x1x32xf32> to vector<1x32xf32>
    %cst_36 = arith.constant dense<0.000000e+00> : vector<16xf32>
    %91 = vector.multi_reduction <add>, %86, %cst_36 [1] : vector<16x32xf32> to vector<16xf32>
    %92 = vector.shape_cast %91 : vector<16xf32> to vector<16x1xf32>
    %cst_37 = arith.constant 3.200000e+01 : f32
    %93 = vector.broadcast %cst_37 : f32 to vector<16x1xf32>
    %94 = arith.divf %92, %93 : vector<16x1xf32>
    %95 = vector.broadcast %94 : vector<16x1xf32> to vector<16x32xf32>
    %96 = arith.subf %86, %95 : vector<16x32xf32>
    %97 = arith.mulf %96, %96 : vector<16x32xf32>
    %cst_38 = arith.constant dense<0.000000e+00> : vector<16xf32>
    %98 = vector.multi_reduction <add>, %97, %cst_38 [1] : vector<16x32xf32> to vector<16xf32>
    %99 = vector.shape_cast %98 : vector<16xf32> to vector<16x1xf32>
    %cst_39 = arith.constant 3.200000e+01 : f32
    %100 = vector.broadcast %cst_39 : f32 to vector<16x1xf32>
    %101 = arith.divf %99, %100 : vector<16x1xf32>
    %102 = vector.broadcast %94 : vector<16x1xf32> to vector<16x32xf32>
    %103 = arith.subf %86, %102 : vector<16x32xf32>
    %cst_40 = arith.constant 9.99999996E-13 : f32
    %104 = vector.broadcast %cst_40 : f32 to vector<16x1xf32>
    %105 = arith.addf %101, %104 : vector<16x1xf32>
    %106 = math.rsqrt %105 : vector<16x1xf32>
    %107 = vector.broadcast %106 : vector<16x1xf32> to vector<16x32xf32>
    %108 = arith.mulf %103, %107 : vector<16x32xf32>
    %109 = vector.broadcast %88 : vector<1x32xf32> to vector<16x32xf32>
    %110 = arith.mulf %108, %109 : vector<16x32xf32>
    %111 = vector.broadcast %90 : vector<1x32xf32> to vector<16x32xf32>
    %112 = arith.addf %110, %111 : vector<16x32xf32>
    %113 = arith.truncf %112 : vector<16x32xf32> to vector<16x32xbf16>
    %c0_41 = arith.constant 0 : index
    %c0_42 = arith.constant 0 : index
    %c0_43 = arith.constant 0 : index
    %114 = vector.load %arg10[%c0_41, %c0_42, %c0_43] : memref<2x32x64xbf16, #tpu.memory_space<vmem>>, vector<1x32x64xbf16>
    %115 = vector.shape_cast %114 : vector<1x32x64xbf16> to vector<32x64xbf16>
    %cst_44 = arith.constant dense<0.000000e+00> : vector<16x64xf32>
    %116 = tpu.matmul %113, %115, %cst_44 {dimension_numbers = #tpu.dot_dimension_numbers<[1], [0], [0], [1], [0, 0, 1, 1], [], []>} : vector<16x32xbf16>, vector<32x64xbf16>, vector<16x64xf32> -> vector<16x64xf32>
    %c0_45 = arith.constant 0 : index
    %c0_46 = arith.constant 0 : index
    %c0_47 = arith.constant 0 : index
    %117 = vector.load %arg11[%c0_45, %c0_46, %c0_47] : memref<2x1x64xf32, #tpu.memory_space<vmem>>, vector<1x1x64xf32>
    %118 = vector.shape_cast %117 : vector<1x1x64xf32> to vector<1x64xf32>
    %119 = vector.broadcast %118 : vector<1x64xf32> to vector<16x64xf32>
    %120 = arith.addf %116, %119 : vector<16x64xf32>
    %cst_48 = arith.constant 0.707106769 : f32
    %121 = vector.broadcast %cst_48 : f32 to vector<16x64xf32>
    %122 = arith.mulf %120, %121 : vector<16x64xf32>
    %123 = math.erf %122 : vector<16x64xf32>
    %cst_49 = arith.constant 1.000000e+00 : f32
    %124 = vector.broadcast %cst_49 : f32 to vector<16x64xf32>
    %125 = arith.addf %124, %123 : vector<16x64xf32>
    %126 = arith.mulf %120, %125 : vector<16x64xf32>
    %127 = arith.truncf %126 : vector<16x64xf32> to vector<16x64xbf16>
    %c0_50 = arith.constant 0 : index
    %c0_51 = arith.constant 0 : index
    %c0_52 = arith.constant 0 : index
    %128 = vector.load %arg12[%c0_50, %c0_51, %c0_52] : memref<2x64x32xbf16, #tpu.memory_space<vmem>>, vector<1x64x32xbf16>
    %129 = vector.shape_cast %128 : vector<1x64x32xbf16> to vector<64x32xbf16>
    %cst_53 = arith.constant dense<0.000000e+00> : vector<16x32xf32>
    %130 = tpu.matmul %127, %129, %cst_53 {dimension_numbers = #tpu.dot_dimension_numbers<[1], [0], [0], [1], [0, 0, 1, 1], [], []>} : vector<16x64xbf16>, vector<64x32xbf16>, vector<16x32xf32> -> vector<16x32xf32>
    %c0_54 = arith.constant 0 : index
    %c0_55 = arith.constant 0 : index
    %c0_56 = arith.constant 0 : index
    %131 = vector.load %arg13[%c0_54, %c0_55, %c0_56] : memref<2x1x32xf32, #tpu.memory_space<vmem>>, vector<1x1x32xf32>
    %132 = vector.shape_cast %131 : vector<1x1x32xf32> to vector<1x32xf32>
    %133 = vector.broadcast %132 : vector<1x32xf32> to vector<16x32xf32>
    %134 = arith.addf %130, %133 : vector<16x32xf32>
    %135 = arith.addf %134, %112 : vector<16x32xf32>
    %c0_57 = arith.constant 0 : index
    %c0_58 = arith.constant 0 : index
    %c0_59 = arith.constant 0 : index
    %136 = vector.load %arg14[%c0_57, %c0_58, %c0_59] : memref<2x1x32xf32, #tpu.memory_space<vmem>>, vector<1x1x32xf32>
    %137 = vector.shape_cast %136 : vector<1x1x32xf32> to vector<1x32xf32>
    %c0_60 = arith.constant 0 : index
    %c0_61 = arith.constant 0 : index
    %c0_62 = arith.constant 0 : index
    %138 = vector.load %arg15[%c0_60, %c0_61, %c0_62] : memref<2x1x32xf32, #tpu.memory_space<vmem>>, vector<1x1x32xf32>
    %139 = vector.shape_cast %138 : vector<1x1x32xf32> to vector<1x32xf32>
    %cst_63 = arith.constant dense<0.000000e+00> : vector<16xf32>
    %140 = vector.multi_reduction <add>, %135, %cst_63 [1] : vector<16x32xf32> to vector<16xf32>
    %141 = vector.shape_cast %140 : vector<16xf32> to vector<16x1xf32>
    %cst_64 = arith.constant 3.200000e+01 : f32
    %142 = vector.broadcast %cst_64 : f32 to vector<16x1xf32>
    %143 = arith.divf %141, %142 : vector<16x1xf32>
    %144 = vector.broadcast %143 : vector<16x1xf32> to vector<16x32xf32>
    %145 = arith.subf %135, %144 : vector<16x32xf32>
    %146 = arith.mulf %145, %145 : vector<16x32xf32>
    %cst_65 = arith.constant dense<0.000000e+00> : vector<16xf32>
    %147 = vector.multi_reduction <add>, %146, %cst_65 [1] : vector<16x32xf32> to vector<16xf32>
    %148 = vector.shape_cast %147 : vector<16xf32> to vector<16x1xf32>
    %cst_66 = arith.constant 3.200000e+01 : f32
    %149 = vector.broadcast %cst_66 : f32 to vector<16x1xf32>
    %150 = arith.divf %148, %149 : vector<16x1xf32>
    %151 = vector.broadcast %143 : vector<16x1xf32> to vector<16x32xf32>
    %152 = arith.subf %135, %151 : vector<16x32xf32>
    %cst_67 = arith.constant 9.99999996E-13 : f32
    %153 = vector.broadcast %cst_67 : f32 to vector<16x1xf32>
    %154 = arith.addf %150, %153 : vector<16x1xf32>
    %155 = math.rsqrt %154 : vector<16x1xf32>
    %156 = vector.broadcast %155 : vector<16x1xf32> to vector<16x32xf32>
    %157 = arith.mulf %152, %156 : vector<16x32xf32>
    %158 = vector.broadcast %137 : vector<1x32xf32> to vector<16x32xf32>
    %159 = arith.mulf %157, %158 : vector<16x32xf32>
    %160 = vector.broadcast %139 : vector<1x32xf32> to vector<16x32xf32>
    %161 = arith.addf %159, %160 : vector<16x32xf32>
    %162 = arith.truncf %161 : vector<16x32xf32> to vector<16x32xbf16>
    %c1 = arith.constant 1 : index
    %c0_68 = arith.constant 0 : index
    %c0_69 = arith.constant 0 : index
    %163 = vector.load %arg4[%c1, %c0_68, %c0_69] : memref<2x32x96xbf16, #tpu.memory_space<vmem>>, vector<1x32x96xbf16>
    %164 = vector.shape_cast %163 : vector<1x32x96xbf16> to vector<32x96xbf16>
    %cst_70 = arith.constant dense<0.000000e+00> : vector<16x96xf32>
    %165 = tpu.matmul %162, %164, %cst_70 {dimension_numbers = #tpu.dot_dimension_numbers<[1], [0], [0], [1], [0, 0, 1, 1], [], []>} : vector<16x32xbf16>, vector<32x96xbf16>, vector<16x96xf32> -> vector<16x96xf32>
    %c1_71 = arith.constant 1 : index
    %c0_72 = arith.constant 0 : index
    %c0_73 = arith.constant 0 : index
    %166 = vector.load %arg5[%c1_71, %c0_72, %c0_73] : memref<2x1x96xf32, #tpu.memory_space<vmem>>, vector<1x1x96xf32>
    %167 = vector.shape_cast %166 : vector<1x1x96xf32> to vector<1x96xf32>
    %168 = vector.broadcast %167 : vector<1x96xf32> to vector<16x96xf32>
    %169 = arith.addf %165, %168 : vector<16x96xf32>
    %170 = vector.extract_strided_slice %169 {offsets = [0, 0], sizes = [16, 32], strides = [1, 1]} : vector<16x96xf32> to vector<16x32xf32>
    %171 = vector.extract_strided_slice %169 {offsets = [0, 32], sizes = [16, 32], strides = [1, 1]} : vector<16x96xf32> to vector<16x32xf32>
    %172 = vector.extract_strided_slice %169 {offsets = [0, 64], sizes = [16, 32], strides = [1, 1]} : vector<16x96xf32> to vector<16x32xf32>
    %173 = vector.extract_strided_slice %170 {offsets = [0, 0], sizes = [8, 16], strides = [1, 1]} : vector<16x32xf32> to vector<8x16xf32>
    %174 = vector.extract_strided_slice %170 {offsets = [0, 16], sizes = [8, 16], strides = [1, 1]} : vector<16x32xf32> to vector<8x16xf32>
    %175 = vector.extract_strided_slice %170 {offsets = [8, 0], sizes = [8, 16], strides = [1, 1]} : vector<16x32xf32> to vector<8x16xf32>
    %176 = vector.extract_strided_slice %170 {offsets = [8, 16], sizes = [8, 16], strides = [1, 1]} : vector<16x32xf32> to vector<8x16xf32>
    %177 = tpu.concatenate %173, %174, %175, %176 in 0 : vector<8x16xf32>, vector<8x16xf32>, vector<8x16xf32>, vector<8x16xf32> -> vector<32x16xf32>
    %178 = vector.extract_strided_slice %171 {offsets = [0, 0], sizes = [8, 16], strides = [1, 1]} : vector<16x32xf32> to vector<8x16xf32>
    %179 = vector.extract_strided_slice %171 {offsets = [0, 16], sizes = [8, 16], strides = [1, 1]} : vector<16x32xf32> to vector<8x16xf32>
    %180 = vector.extract_strided_slice %171 {offsets = [8, 0], sizes = [8, 16], strides = [1, 1]} : vector<16x32xf32> to vector<8x16xf32>
    %181 = vector.extract_strided_slice %171 {offsets = [8, 16], sizes = [8, 16], strides = [1, 1]} : vector<16x32xf32> to vector<8x16xf32>
    %182 = tpu.concatenate %178, %179, %180, %181 in 0 : vector<8x16xf32>, vector<8x16xf32>, vector<8x16xf32>, vector<8x16xf32> -> vector<32x16xf32>
    %183 = vector.extract_strided_slice %172 {offsets = [0, 0], sizes = [8, 16], strides = [1, 1]} : vector<16x32xf32> to vector<8x16xf32>
    %184 = vector.extract_strided_slice %172 {offsets = [0, 16], sizes = [8, 16], strides = [1, 1]} : vector<16x32xf32> to vector<8x16xf32>
    %185 = vector.extract_strided_slice %172 {offsets = [8, 0], sizes = [8, 16], strides = [1, 1]} : vector<16x32xf32> to vector<8x16xf32>
    %186 = vector.extract_strided_slice %172 {offsets = [8, 16], sizes = [8, 16], strides = [1, 1]} : vector<16x32xf32> to vector<8x16xf32>
    %187 = tpu.concatenate %183, %184, %185, %186 in 0 : vector<8x16xf32>, vector<8x16xf32>, vector<8x16xf32>, vector<8x16xf32> -> vector<32x16xf32>
    %188 = arith.truncf %177 : vector<32x16xf32> to vector<32x16xbf16>
    %189 = arith.truncf %182 : vector<32x16xf32> to vector<32x16xbf16>
    %cst_74 = arith.constant dense<0.000000e+00> : vector<32x32xf32>
    %190 = tpu.matmul %188, %189, %cst_74 {dimension_numbers = #tpu.dot_dimension_numbers<[1], [1], [0], [0], [0, 0, 1, 0], [], []>} : vector<32x16xbf16>, vector<32x16xbf16>, vector<32x32xf32> -> vector<32x32xf32>
    %cst_75 = arith.constant 2.500000e-01 : f32
    %191 = vector.broadcast %cst_75 : f32 to vector<32x32xf32>
    %192 = arith.mulf %190, %191 : vector<32x32xf32>
    %193 = arith.addf %192, %0 : vector<32x32xf32>
    %cst_76 = arith.constant dense<0xFF800000> : vector<32xf32>
    %194 = vector.multi_reduction <maximumf>, %193, %cst_76 [1] : vector<32x32xf32> to vector<32xf32>
    %195 = vector.shape_cast %194 : vector<32xf32> to vector<32x1xf32>
    %196 = vector.broadcast %195 : vector<32x1xf32> to vector<32x32xf32>
    %197 = arith.subf %193, %196 : vector<32x32xf32>
    %198 = math.exp %197 : vector<32x32xf32>
    %cst_77 = arith.constant dense<0.000000e+00> : vector<32xf32>
    %199 = vector.multi_reduction <add>, %198, %cst_77 [1] : vector<32x32xf32> to vector<32xf32>
    %200 = vector.shape_cast %199 : vector<32xf32> to vector<32x1xf32>
    %201 = tpu.reciprocal %200 {approx = true} : vector<32x1xf32> -> vector<32x1xf32>
    %202 = vector.broadcast %201 : vector<32x1xf32> to vector<32x32xf32>
    %203 = arith.mulf %198, %202 : vector<32x32xf32>
    %204 = arith.truncf %203 : vector<32x32xf32> to vector<32x32xbf16>
    %205 = arith.truncf %187 : vector<32x16xf32> to vector<32x16xbf16>
    %cst_78 = arith.constant dense<0.000000e+00> : vector<32x16xf32>
    %206 = tpu.matmul %204, %205, %cst_78 {dimension_numbers = #tpu.dot_dimension_numbers<[1], [0], [0], [1], [0, 0, 1, 1], [], []>} : vector<32x32xbf16>, vector<32x16xbf16>, vector<32x16xf32> -> vector<32x16xf32>
    %207 = vector.extract_strided_slice %206 {offsets = [0, 0], sizes = [8, 16], strides = [1, 1]} : vector<32x16xf32> to vector<8x16xf32>
    %208 = vector.extract_strided_slice %206 {offsets = [8, 0], sizes = [8, 16], strides = [1, 1]} : vector<32x16xf32> to vector<8x16xf32>
    %209 = tpu.concatenate %207, %208 in 1 : vector<8x16xf32>, vector<8x16xf32> -> vector<8x32xf32>
    %210 = vector.extract_strided_slice %206 {offsets = [16, 0], sizes = [8, 16], strides = [1, 1]} : vector<32x16xf32> to vector<8x16xf32>
    %211 = vector.extract_strided_slice %206 {offsets = [24, 0], sizes = [8, 16], strides = [1, 1]} : vector<32x16xf32> to vector<8x16xf32>
    %212 = tpu.concatenate %210, %211 in 1 : vector<8x16xf32>, vector<8x16xf32> -> vector<8x32xf32>
    %213 = tpu.concatenate %209, %212 in 0 : vector<8x32xf32>, vector<8x32xf32> -> vector<16x32xf32>
    %214 = arith.truncf %213 : vector<16x32xf32> to vector<16x32xbf16>
    %c1_79 = arith.constant 1 : index
    %c0_80 = arith.constant 0 : index
    %c0_81 = arith.constant 0 : index
    %215 = vector.load %arg6[%c1_79, %c0_80, %c0_81] : memref<2x32x32xbf16, #tpu.memory_space<vmem>>, vector<1x32x32xbf16>
    %216 = vector.shape_cast %215 : vector<1x32x32xbf16> to vector<32x32xbf16>
    %cst_82 = arith.constant dense<0.000000e+00> : vector<16x32xf32>
    %217 = tpu.matmul %214, %216, %cst_82 {dimension_numbers = #tpu.dot_dimension_numbers<[1], [0], [0], [1], [0, 0, 1, 1], [], []>} : vector<16x32xbf16>, vector<32x32xbf16>, vector<16x32xf32> -> vector<16x32xf32>
    %c1_83 = arith.constant 1 : index
    %c0_84 = arith.constant 0 : index
    %c0_85 = arith.constant 0 : index
    %218 = vector.load %arg7[%c1_83, %c0_84, %c0_85] : memref<2x1x32xf32, #tpu.memory_space<vmem>>, vector<1x1x32xf32>
    %219 = vector.shape_cast %218 : vector<1x1x32xf32> to vector<1x32xf32>
    %220 = vector.broadcast %219 : vector<1x32xf32> to vector<16x32xf32>
    %221 = arith.addf %217, %220 : vector<16x32xf32>
    %222 = arith.addf %221, %161 : vector<16x32xf32>
    %c1_86 = arith.constant 1 : index
    %c0_87 = arith.constant 0 : index
    %c0_88 = arith.constant 0 : index
    %223 = vector.load %arg8[%c1_86, %c0_87, %c0_88] : memref<2x1x32xf32, #tpu.memory_space<vmem>>, vector<1x1x32xf32>
    %224 = vector.shape_cast %223 : vector<1x1x32xf32> to vector<1x32xf32>
    %c1_89 = arith.constant 1 : index
    %c0_90 = arith.constant 0 : index
    %c0_91 = arith.constant 0 : index
    %225 = vector.load %arg9[%c1_89, %c0_90, %c0_91] : memref<2x1x32xf32, #tpu.memory_space<vmem>>, vector<1x1x32xf32>
    %226 = vector.shape_cast %225 : vector<1x1x32xf32> to vector<1x32xf32>
    %cst_92 = arith.constant dense<0.000000e+00> : vector<16xf32>
    %227 = vector.multi_reduction <add>, %222, %cst_92 [1] : vector<16x32xf32> to vector<16xf32>
    %228 = vector.shape_cast %227 : vector<16xf32> to vector<16x1xf32>
    %cst_93 = arith.constant 3.200000e+01 : f32
    %229 = vector.broadcast %cst_93 : f32 to vector<16x1xf32>
    %230 = arith.divf %228, %229 : vector<16x1xf32>
    %231 = vector.broadcast %230 : vector<16x1xf32> to vector<16x32xf32>
    %232 = arith.subf %222, %231 : vector<16x32xf32>
    %233 = arith.mulf %232, %232 : vector<16x32xf32>
    %cst_94 = arith.constant dense<0.000000e+00> : vector<16xf32>
    %234 = vector.multi_reduction <add>, %233, %cst_94 [1] : vector<16x32xf32> to vector<16xf32>
    %235 = vector.shape_cast %234 : vector<16xf32> to vector<16x1xf32>
    %cst_95 = arith.constant 3.200000e+01 : f32
    %236 = vector.broadcast %cst_95 : f32 to vector<16x1xf32>
    %237 = arith.divf %235, %236 : vector<16x1xf32>
    %238 = vector.broadcast %230 : vector<16x1xf32> to vector<16x32xf32>
    %239 = arith.subf %222, %238 : vector<16x32xf32>
    %cst_96 = arith.constant 9.99999996E-13 : f32
    %240 = vector.broadcast %cst_96 : f32 to vector<16x1xf32>
    %241 = arith.addf %237, %240 : vector<16x1xf32>
    %242 = math.rsqrt %241 : vector<16x1xf32>
    %243 = vector.broadcast %242 : vector<16x1xf32> to vector<16x32xf32>
    %244 = arith.mulf %239, %243 : vector<16x32xf32>
    %245 = vector.broadcast %224 : vector<1x32xf32> to vector<16x32xf32>
    %246 = arith.mulf %244, %245 : vector<16x32xf32>
    %247 = vector.broadcast %226 : vector<1x32xf32> to vector<16x32xf32>
    %248 = arith.addf %246, %247 : vector<16x32xf32>
    %249 = arith.truncf %248 : vector<16x32xf32> to vector<16x32xbf16>
    %c1_97 = arith.constant 1 : index
    %c0_98 = arith.constant 0 : index
    %c0_99 = arith.constant 0 : index
    %250 = vector.load %arg10[%c1_97, %c0_98, %c0_99] : memref<2x32x64xbf16, #tpu.memory_space<vmem>>, vector<1x32x64xbf16>
    %251 = vector.shape_cast %250 : vector<1x32x64xbf16> to vector<32x64xbf16>
    %cst_100 = arith.constant dense<0.000000e+00> : vector<16x64xf32>
    %252 = tpu.matmul %249, %251, %cst_100 {dimension_numbers = #tpu.dot_dimension_numbers<[1], [0], [0], [1], [0, 0, 1, 1], [], []>} : vector<16x32xbf16>, vector<32x64xbf16>, vector<16x64xf32> -> vector<16x64xf32>
    %c1_101 = arith.constant 1 : index
    %c0_102 = arith.constant 0 : index
    %c0_103 = arith.constant 0 : index
    %253 = vector.load %arg11[%c1_101, %c0_102, %c0_103] : memref<2x1x64xf32, #tpu.memory_space<vmem>>, vector<1x1x64xf32>
    %254 = vector.shape_cast %253 : vector<1x1x64xf32> to vector<1x64xf32>
    %255 = vector.broadcast %254 : vector<1x64xf32> to vector<16x64xf32>
    %256 = arith.addf %252, %255 : vector<16x64xf32>
    %cst_104 = arith.constant 0.707106769 : f32
    %257 = vector.broadcast %cst_104 : f32 to vector<16x64xf32>
    %258 = arith.mulf %256, %257 : vector<16x64xf32>
    %259 = math.erf %258 : vector<16x64xf32>
    %cst_105 = arith.constant 1.000000e+00 : f32
    %260 = vector.broadcast %cst_105 : f32 to vector<16x64xf32>
    %261 = arith.addf %260, %259 : vector<16x64xf32>
    %262 = arith.mulf %256, %261 : vector<16x64xf32>
    %263 = arith.truncf %262 : vector<16x64xf32> to vector<16x64xbf16>
    %c1_106 = arith.constant 1 : index
    %c0_107 = arith.constant 0 : index
    %c0_108 = arith.constant 0 : index
    %264 = vector.load %arg12[%c1_106, %c0_107, %c0_108] : memref<2x64x32xbf16, #tpu.memory_space<vmem>>, vector<1x64x32xbf16>
    %265 = vector.shape_cast %264 : vector<1x64x32xbf16> to vector<64x32xbf16>
    %cst_109 = arith.constant dense<0.000000e+00> : vector<16x32xf32>
    %266 = tpu.matmul %263, %265, %cst_109 {dimension_numbers = #tpu.dot_dimension_numbers<[1], [0], [0], [1], [0, 0, 1, 1], [], []>} : vector<16x64xbf16>, vector<64x32xbf16>, vector<16x32xf32> -> vector<16x32xf32>
    %c1_110 = arith.constant 1 : index
    %c0_111 = arith.constant 0 : index
    %c0_112 = arith.constant 0 : index
    %267 = vector.load %arg13[%c1_110, %c0_111, %c0_112] : memref<2x1x32xf32, #tpu.memory_space<vmem>>, vector<1x1x32xf32>
    %268 = vector.shape_cast %267 : vector<1x1x32xf32> to vector<1x32xf32>
    %269 = vector.broadcast %268 : vector<1x32xf32> to vector<16x32xf32>
    %270 = arith.addf %266, %269 : vector<16x32xf32>
    %271 = arith.addf %270, %248 : vector<16x32xf32>
    %c1_113 = arith.constant 1 : index
    %c0_114 = arith.constant 0 : index
    %c0_115 = arith.constant 0 : index
    %272 = vector.load %arg14[%c1_113, %c0_114, %c0_115] : memref<2x1x32xf32, #tpu.memory_space<vmem>>, vector<1x1x32xf32>
    %273 = vector.shape_cast %272 : vector<1x1x32xf32> to vector<1x32xf32>
    %c1_116 = arith.constant 1 : index
    %c0_117 = arith.constant 0 : index
    %c0_118 = arith.constant 0 : index
    %274 = vector.load %arg15[%c1_116, %c0_117, %c0_118] : memref<2x1x32xf32, #tpu.memory_space<vmem>>, vector<1x1x32xf32>
    %275 = vector.shape_cast %274 : vector<1x1x32xf32> to vector<1x32xf32>
    %cst_119 = arith.constant dense<0.000000e+00> : vector<16xf32>
    %276 = vector.multi_reduction <add>, %271, %cst_119 [1] : vector<16x32xf32> to vector<16xf32>
    %277 = vector.shape_cast %276 : vector<16xf32> to vector<16x1xf32>
    %cst_120 = arith.constant 3.200000e+01 : f32
    %278 = vector.broadcast %cst_120 : f32 to vector<16x1xf32>
    %279 = arith.divf %277, %278 : vector<16x1xf32>
    %280 = vector.broadcast %279 : vector<16x1xf32> to vector<16x32xf32>
    %281 = arith.subf %271, %280 : vector<16x32xf32>
    %282 = arith.mulf %281, %281 : vector<16x32xf32>
    %cst_121 = arith.constant dense<0.000000e+00> : vector<16xf32>
    %283 = vector.multi_reduction <add>, %282, %cst_121 [1] : vector<16x32xf32> to vector<16xf32>
    %284 = vector.shape_cast %283 : vector<16xf32> to vector<16x1xf32>
    %cst_122 = arith.constant 3.200000e+01 : f32
    %285 = vector.broadcast %cst_122 : f32 to vector<16x1xf32>
    %286 = arith.divf %284, %285 : vector<16x1xf32>
    %287 = vector.broadcast %279 : vector<16x1xf32> to vector<16x32xf32>
    %288 = arith.subf %271, %287 : vector<16x32xf32>
    %cst_123 = arith.constant 9.99999996E-13 : f32
    %289 = vector.broadcast %cst_123 : f32 to vector<16x1xf32>
    %290 = arith.addf %286, %289 : vector<16x1xf32>
    %291 = math.rsqrt %290 : vector<16x1xf32>
    %292 = vector.broadcast %291 : vector<16x1xf32> to vector<16x32xf32>
    %293 = arith.mulf %288, %292 : vector<16x32xf32>
    %294 = vector.broadcast %273 : vector<1x32xf32> to vector<16x32xf32>
    %295 = arith.mulf %293, %294 : vector<16x32xf32>
    %296 = vector.broadcast %275 : vector<1x32xf32> to vector<16x32xf32>
    %297 = arith.addf %295, %296 : vector<16x32xf32>
    %298 = arith.truncf %297 : vector<16x32xf32> to vector<16x32xbf16>
    %c0_124 = arith.constant 0 : index
    %c0_125 = arith.constant 0 : index
    %299 = vector.load %arg16[%c0_124, %c0_125] : memref<32x32xbf16, #tpu.memory_space<vmem>>, vector<32x32xbf16>
    %cst_126 = arith.constant dense<0.000000e+00> : vector<16x32xf32>
    %300 = tpu.matmul %298, %299, %cst_126 {dimension_numbers = #tpu.dot_dimension_numbers<[1], [0], [0], [1], [0, 0, 1, 1], [], []>} : vector<16x32xbf16>, vector<32x32xbf16>, vector<16x32xf32> -> vector<16x32xf32>
    %c0_127 = arith.constant 0 : index
    %c0_128 = arith.constant 0 : index
    %301 = vector.load %arg17[%c0_127, %c0_128] : memref<1x32xf32, #tpu.memory_space<vmem>>, vector<1x32xf32>
    %302 = vector.broadcast %301 : vector<1x32xf32> to vector<16x32xf32>
    %303 = arith.addf %300, %302 : vector<16x32xf32>
    %304 = math.tanh %303 : vector<16x32xf32>
    %305 = arith.truncf %304 : vector<16x32xf32> to vector<16x32xbf16>
    %c0_129 = arith.constant 0 : index
    %c0_130 = arith.constant 0 : index
    %306 = vector.load %arg18[%c0_129, %c0_130] : memref<32x1xbf16, #tpu.memory_space<vmem>>, vector<32x1xbf16>
    %cst_131 = arith.constant dense<0.000000e+00> : vector<16x1xf32>
    %307 = tpu.matmul %305, %306, %cst_131 {dimension_numbers = #tpu.dot_dimension_numbers<[1], [0], [0], [1], [0, 0, 1, 1], [], []>} : vector<16x32xbf16>, vector<32x1xbf16>, vector<16x1xf32> -> vector<16x1xf32>
    %c0_132 = arith.constant 0 : index
    %c0_133 = arith.constant 0 : index
    %308 = vector.load %arg19[%c0_132, %c0_133] : memref<1x1xf32, #tpu.memory_space<vmem>>, vector<1x1xf32>
    %309 = vector.broadcast %308 : vector<1x1xf32> to vector<16x1xf32>
    %310 = arith.addf %307, %309 : vector<16x1xf32>
    %cst_134 = arith.constant 0.000000e+00 : f32
    %311 = vector.broadcast %cst_134 : f32 to vector<2x32xf32>
    %312 = tpu.iota {dimensions = array<i32: 0>} : vector<2x1xi32>
    %313 = vector.extract_strided_slice %310 {offsets = [0, 0], sizes = [8, 1], strides = [1, 1]} : vector<16x1xf32> to vector<8x1xf32>
    %cst_135 = arith.constant dense<0xFF800000> : vector<1xf32>
    %314 = vector.multi_reduction <maximumf>, %313, %cst_135 [0] : vector<8x1xf32> to vector<1xf32>
    %315 = vector.shape_cast %314 : vector<1xf32> to vector<1x1xf32>
    %316 = vector.broadcast %315 : vector<1x1xf32> to vector<8x1xf32>
    %317 = arith.subf %313, %316 : vector<8x1xf32>
    %318 = math.exp %317 : vector<8x1xf32>
    %cst_136 = arith.constant dense<0.000000e+00> : vector<1xf32>
    %319 = vector.multi_reduction <add>, %318, %cst_136 [0] : vector<8x1xf32> to vector<1xf32>
    %320 = vector.shape_cast %319 : vector<1xf32> to vector<1x1xf32>
    %321 = tpu.reciprocal %320 {approx = true} : vector<1x1xf32> -> vector<1x1xf32>
    %322 = vector.broadcast %321 : vector<1x1xf32> to vector<8x1xf32>
    %323 = arith.mulf %318, %322 : vector<8x1xf32>
    %324 = arith.truncf %323 : vector<8x1xf32> to vector<8x1xbf16>
    %325 = vector.extract_strided_slice %297 {offsets = [0, 0], sizes = [8, 32], strides = [1, 1]} : vector<16x32xf32> to vector<8x32xf32>
    %326 = arith.truncf %325 : vector<8x32xf32> to vector<8x32xbf16>
    %cst_137 = arith.constant dense<0.000000e+00> : vector<1x32xf32>
    %327 = tpu.matmul %324, %326, %cst_137 {dimension_numbers = #tpu.dot_dimension_numbers<[0], [0], [1], [1], [0, 1, 1, 1], [], []>} : vector<8x1xbf16>, vector<8x32xbf16>, vector<1x32xf32> -> vector<1x32xf32>
    %c0_i32 = arith.constant 0 : i32
    %328 = vector.broadcast %c0_i32 : i32 to vector<2x1xi32>
    %329 = arith.cmpi eq, %312, %328 : vector<2x1xi32>
    %cst_138 = arith.constant 0.000000e+00 : f32
    %330 = vector.shape_cast %329 : vector<2x1xi1> to vector<2x1xi1>
    %331 = vector.broadcast %330 : vector<2x1xi1> to vector<2x32xi1>
    %332 = vector.shape_cast %327 : vector<1x32xf32> to vector<1x32xf32>
    %333 = vector.broadcast %332 : vector<1x32xf32> to vector<2x32xf32>
    %334 = vector.broadcast %cst_138 : f32 to vector<2x32xf32>
    %335 = arith.select %331, %333, %334 : vector<2x32xi1>, vector<2x32xf32>
    %336 = arith.addf %311, %335 : vector<2x32xf32>
    %337 = vector.extract_strided_slice %310 {offsets = [8, 0], sizes = [8, 1], strides = [1, 1]} : vector<16x1xf32> to vector<8x1xf32>
    %cst_139 = arith.constant dense<0xFF800000> : vector<1xf32>
    %338 = vector.multi_reduction <maximumf>, %337, %cst_139 [0] : vector<8x1xf32> to vector<1xf32>
    %339 = vector.shape_cast %338 : vector<1xf32> to vector<1x1xf32>
    %340 = vector.broadcast %339 : vector<1x1xf32> to vector<8x1xf32>
    %341 = arith.subf %337, %340 : vector<8x1xf32>
    %342 = math.exp %341 : vector<8x1xf32>
    %cst_140 = arith.constant dense<0.000000e+00> : vector<1xf32>
    %343 = vector.multi_reduction <add>, %342, %cst_140 [0] : vector<8x1xf32> to vector<1xf32>
    %344 = vector.shape_cast %343 : vector<1xf32> to vector<1x1xf32>
    %345 = tpu.reciprocal %344 {approx = true} : vector<1x1xf32> -> vector<1x1xf32>
    %346 = vector.broadcast %345 : vector<1x1xf32> to vector<8x1xf32>
    %347 = arith.mulf %342, %346 : vector<8x1xf32>
    %348 = arith.truncf %347 : vector<8x1xf32> to vector<8x1xbf16>
    %349 = vector.extract_strided_slice %297 {offsets = [8, 0], sizes = [8, 32], strides = [1, 1]} : vector<16x32xf32> to vector<8x32xf32>
    %350 = arith.truncf %349 : vector<8x32xf32> to vector<8x32xbf16>
    %cst_141 = arith.constant dense<0.000000e+00> : vector<1x32xf32>
    %351 = tpu.matmul %348, %350, %cst_141 {dimension_numbers = #tpu.dot_dimension_numbers<[0], [0], [1], [1], [0, 1, 1, 1], [], []>} : vector<8x1xbf16>, vector<8x32xbf16>, vector<1x32xf32> -> vector<1x32xf32>
    %c1_i32 = arith.constant 1 : i32
    %352 = vector.broadcast %c1_i32 : i32 to vector<2x1xi32>
    %353 = arith.cmpi eq, %312, %352 : vector<2x1xi32>
    %cst_142 = arith.constant 0.000000e+00 : f32
    %354 = vector.shape_cast %353 : vector<2x1xi1> to vector<2x1xi1>
    %355 = vector.broadcast %354 : vector<2x1xi1> to vector<2x32xi1>
    %356 = vector.shape_cast %351 : vector<1x32xf32> to vector<1x32xf32>
    %357 = vector.broadcast %356 : vector<1x32xf32> to vector<2x32xf32>
    %358 = vector.broadcast %cst_142 : f32 to vector<2x32xf32>
    %359 = arith.select %355, %357, %358 : vector<2x32xi1>, vector<2x32xf32>
    %360 = arith.addf %336, %359 : vector<2x32xf32>
    %361 = arith.truncf %360 : vector<2x32xf32> to vector<2x32xbf16>
    %c0_143 = arith.constant 0 : index
    %c0_144 = arith.constant 0 : index
    %362 = vector.load %arg20[%c0_143, %c0_144] : memref<32x2xbf16, #tpu.memory_space<vmem>>, vector<32x2xbf16>
    %cst_145 = arith.constant dense<0.000000e+00> : vector<2x2xf32>
    %363 = tpu.matmul %361, %362, %cst_145 {dimension_numbers = #tpu.dot_dimension_numbers<[1], [0], [0], [1], [0, 0, 1, 1], [], []>} : vector<2x32xbf16>, vector<32x2xbf16>, vector<2x2xf32> -> vector<2x2xf32>
    %c0_146 = arith.constant 0 : index
    %c0_147 = arith.constant 0 : index
    %364 = vector.load %arg21[%c0_146, %c0_147] : memref<1x2xf32, #tpu.memory_space<vmem>>, vector<1x2xf32>
    %365 = vector.broadcast %364 : vector<1x2xf32> to vector<2x2xf32>
    %366 = arith.addf %363, %365 : vector<2x2xf32>
    %c0_148 = arith.constant 0 : index
    %c0_149 = arith.constant 0 : index
    %367 = vector.load %arg22[%c0_148, %c0_149] : memref<2x2xf32, #tpu.memory_space<vmem>>, vector<2x2xf32>
    tpu.vector_store %arg22[%c0_148, %c0_149], %366 {strides = array<i32>} : memref<2x2xf32, #tpu.memory_space<vmem>>, vector<2x2xf32>,
    return
  }
}

</mosaic_0001>

<llo_original>
// kernel: tpu_custom_call.1
$region0: #{tpu_custom_call.1}
  #allocation0 [shape = 'u32[]', space=smem, size = 0x4, offset = 0x4, fixed_abs, tag = 'smem constant byte address 0x4 - core index']
  #allocation1 [shape = 'u32[144,128]{1,0:T(1,128)}', space=vmem, size = 0x12000, scoped, tag = 'internal scratch']
  #allocation2 [shape = 'f32[1,1]{1,0:T(1,128)S(1)}', space=vmem, size = 0x200, scoped, tag = 'scoped memory for tpu_custom_call.1']
  %s0 = inlined_call_operand.vmem [shape: f32[16,32], index: 0, kind: input, shape index: {}]
  %s1 = inlined_call_operand.vmem [shape: f32[32,32], index: 1, kind: input, shape index: {}]
  %s2 = inlined_call_operand.hbm [shape: f32[1,32], index: 2, kind: input, shape index: {}]
  %s3 = inlined_call_operand.hbm [shape: f32[1,32], index: 3, kind: input, shape index: {}]
  %s4 = inlined_call_operand.vmem [shape: bf16[2,32,96], index: 4, kind: input, shape index: {}]
  %s5 = inlined_call_operand.hbm [shape: f32[2,1,96], index: 5, kind: input, shape index: {}]
  %s6 = inlined_call_operand.vmem [shape: bf16[2,32,32], index: 6, kind: input, shape index: {}]
  %s7 = inlined_call_operand.hbm [shape: f32[2,1,32], index: 7, kind: input, shape index: {}]
  %s8 = inlined_call_operand.hbm [shape: f32[2,1,32], index: 8, kind: input, shape index: {}]
  %s9 = inlined_call_operand.hbm [shape: f32[2,1,32], index: 9, kind: input, shape index: {}]
  %s10 = inlined_call_operand.hbm [shape: bf16[2,32,64], index: 10, kind: input, shape index: {}]
  %s11 = inlined_call_operand.hbm [shape: f32[2,1,64], index: 11, kind: input, shape index: {}]
  %s12 = inlined_call_operand.vmem [shape: bf16[2,64,32], index: 12, kind: input, shape index: {}]
  %s13 = inlined_call_operand.hbm [shape: f32[2,1,32], index: 13, kind: input, shape index: {}]
  %s14 = inlined_call_operand.hbm [shape: f32[2,1,32], index: 14, kind: input, shape index: {}]
  %s15 = inlined_call_operand.hbm [shape: f32[2,1,32], index: 15, kind: input, shape index: {}]
  %s16 = inlined_call_operand.vmem [shape: bf16[32,32], index: 16, kind: input, shape index: {}]
  %s17 = inlined_call_operand.vmem [shape: f32[1,32], index: 17, kind: input, shape index: {}]
  %s18 = inlined_call_operand.vmem [shape: bf16[32,1], index: 18, kind: input, shape index: {}]
  %s19 = inlined_call_operand.<no memory space> [shape: f32[1,1], index: 19, kind: input, shape index: {}]
  %s20 = inlined_call_operand.vmem [shape: bf16[32,2], index: 20, kind: input, shape index: {}]
  %s21 = inlined_call_operand.vmem [shape: f32[1,2], index: 21, kind: input, shape index: {}]
  %s22 = inlined_call_operand.hbm [shape: f32[2,2], index: 22, kind: output, shape index: {}]
  %s23 = sld [smem:[#allocation0]]
  $region142: #{tpu_custom_call.1} parent=0
    _
  %s25 = ssub.s32 1, %s23
  %s26 = scalar_select 0, %s25, %s23
  %v27 = vstv %s19
  %28 = vst [vmem:[#allocation2] sm:$0x1] %v27
  $region1: #{tpu_custom_call.1} parent=0
    #allocation3 [shape = 'u8[512]{0}', space=vmem, size = 0x400, scoped, tag = 'input window, operand 2, single buffered']
    #allocation4 [shape = 's32[1]{0}', space=sflag, size = 0x4, scoped, tag = 'scoped memory for tpu_custom_call.1']
    #allocation5 [shape = 's32[1]{0}', space=sflag, size = 0x4, scoped, tag = 'scoped memory for tpu_custom_call.1']
    #allocation6 [shape = 'u8[512]{0}', space=vmem, size = 0x400, scoped, tag = 'input window, operand 3, single buffered']
    #allocation7 [shape = 's32[1]{0}', space=sflag, size = 0x4, scoped, tag = 'scoped memory for tpu_custom_call.1']
    #allocation8 [shape = 'u8[1024]{0}', space=vmem, size = 0x400, scoped, tag = 'input window, operand 5, single buffered']
    #allocation9 [shape = 'u8[1024]{0}', space=vmem, size = 0x400, scoped, tag = 'input window, operand 7, single buffered']
    #allocation10 [shape = 's32[1]{0}', space=sflag, size = 0x4, scoped, tag = 'scoped memory for tpu_custom_call.1']
    #allocation11 [shape = 'u8[1024]{0}', space=vmem, size = 0x400, scoped, tag = 'input window, operand 8, single buffered']
    #allocation12 [shape = 'u8[1024]{0}', space=vmem, size = 0x400, scoped, tag = 'input window, operand 9, single buffered']
    #allocation13 [shape = 's32[1]{0}', space=sflag, size = 0x4, scoped, tag = 'scoped memory for tpu_custom_call.1']
    #allocation14 [shape = 'u8[16384]{0}', space=vmem, size = 0x4000, scoped, tag = 'input window, operand 10, single buffered']
    #allocation15 [shape = 'u8[1024]{0}', space=vmem, size = 0x400, scoped, tag = 'input window, operand 11, single buffered']
    #allocation16 [shape = 's32[1]{0}', space=sflag, size = 0x4, scoped, tag = 'scoped memory for tpu_custom_call.1']
    #allocation17 [shape = 'u8[1024]{0}', space=vmem, size = 0x400, scoped, tag = 'input window, operand 13, single buffered']
    #allocation18 [shape = 'u8[1024]{0}', space=vmem, size = 0x400, scoped, tag = 'input window, operand 14, single buffered']
    #allocation19 [shape = 's32[1]{0}', space=sflag, size = 0x4, scoped, tag = 'scoped memory for tpu_custom_call.1']
    #allocation20 [shape = 'u8[1024]{0}', space=vmem, size = 0x400, scoped, tag = 'input window, operand 15, single buffered']
    #allocation21 [shape = 'u8[1024]{0}', space=vmem, size = 0x400, scoped, tag = 'output window, operand 0, single buffered']
    %29 = vsyncpa [#allocation4], 0
    %30 = vsyncpa [#allocation7], 0
    %31 = vsyncpa [#allocation10], 0
    %32 = vsyncpa [#allocation13], 0
    %33 = vsyncpa [#allocation16], 0
    %34 = vsyncpa [#allocation19], 0
    %35 = vsyncpa [#allocation5], 0
    // Predicated region
    $region2: #{tpu_custom_call.1} parent=1 // pred_check
      _
    $region3: #{tpu_custom_call.1} parent=1 // pred_check_branch
      %37 = sbr.rel (0) target = $region5
    $region4: #{tpu_custom_call.1} parent=1 // pred_region
      _
    $region5: #{tpu_custom_call.1} parent=1 // pred_fallthru
      _
    // Predicated region
    $region6: #{tpu_custom_call.1} parent=1 // pred_check
      _
    $region7: #{tpu_custom_call.1} parent=1 // pred_check_branch
      %39 = sbr.rel (0) target = $region9
    $region8: #{tpu_custom_call.1} parent=1 // pred_region
      _
    $region9: #{tpu_custom_call.1} parent=1 // pred_fallthru
      _
    // Predicated region
    $region10: #{tpu_custom_call.1} parent=1 // pred_check
      _
    $region11: #{tpu_custom_call.1} parent=1 // pred_check_branch
      %41 = sbr.rel (0) target = $region13
    $region12: #{tpu_custom_call.1} parent=1 // pred_region
      %s43 = ssub.s32 16, 16
      %44 = vsyncadd [#allocation4], %s43
      %s46 = sshll.u32 [#allocation3], 4
      %s47 = int_to_ptr.vmem [resolvable:$true] %s46
      %49 = dma.hbm_to_vmem [thread:$0]  %s2, 16, %s47, [#allocation4]
    $region13: #{tpu_custom_call.1} parent=1 // pred_fallthru
      _
    // Predicated region
    $region14: #{tpu_custom_call.1} parent=1 // pred_check
      _
    $region15: #{tpu_custom_call.1} parent=1 // pred_check_branch
      %51 = sbr.rel (0) target = $region17
    $region16: #{tpu_custom_call.1} parent=1 // pred_region
      %s53 = ssub.s32 16, 16
      %54 = vsyncadd [#allocation7], %s53
      %s56 = sshll.u32 [#allocation6], 4
      %s57 = int_to_ptr.vmem [resolvable:$true] %s56
      %59 = dma.hbm_to_vmem [thread:$0]  %s3, 16, %s57, [#allocation7]
    $region17: #{tpu_custom_call.1} parent=1 // pred_fallthru
      _
    // Predicated region
    $region18: #{tpu_custom_call.1} parent=1 // pred_check
      _
    $region19: #{tpu_custom_call.1} parent=1 // pred_check_branch
      %61 = sbr.rel (0) target = $region21
    $region20: #{tpu_custom_call.1} parent=1 // pred_region
      _
    $region21: #{tpu_custom_call.1} parent=1 // pred_fallthru
      _
    // Predicated region
    $region22: #{tpu_custom_call.1} parent=1 // pred_check
      _
    $region23: #{tpu_custom_call.1} parent=1 // pred_check_branch
      %63 = sbr.rel (0) target = $region25
    $region24: #{tpu_custom_call.1} parent=1 // pred_region
      %s65 = ssub.s32 32, 32
      %66 = vsyncadd [#allocation7], %s65
      %s67 = sshll.u32 [#allocation8], 4
      %s68 = int_to_ptr.vmem [resolvable:$true] %s67
      %73 = dma.hbm_to_vmem [thread:$0]  %s5, 32, %s68, [#allocation7], 16, 16, 1
    $region25: #{tpu_custom_call.1} parent=1 // pred_fallthru
      _
    // Predicated region
    $region26: #{tpu_custom_call.1} parent=1 // pred_check
      _
    $region27: #{tpu_custom_call.1} parent=1 // pred_check_branch
      %75 = sbr.rel (0) target = $region29
    $region28: #{tpu_custom_call.1} parent=1 // pred_region
      _
    $region29: #{tpu_custom_call.1} parent=1 // pred_fallthru
      _
    // Predicated region
    $region30: #{tpu_custom_call.1} parent=1 // pred_check
      _
    $region31: #{tpu_custom_call.1} parent=1 // pred_check_branch
      %77 = sbr.rel (0) target = $region33
    $region32: #{tpu_custom_call.1} parent=1 // pred_region
      %s79 = ssub.s32 32, 32
      %80 = vsyncadd [#allocation10], %s79
      %s81 = sshll.u32 [#allocation9], 4
      %s82 = int_to_ptr.vmem [resolvable:$true] %s81
      %87 = dma.hbm_to_vmem [thread:$0]  %s7, 32, %s82, [#allocation10], 16, 16, 1
    $region33: #{tpu_custom_call.1} parent=1 // pred_fallthru
      _
    // Predicated region
    $region34: #{tpu_custom_call.1} parent=1 // pred_check
      _
    $region35: #{tpu_custom_call.1} parent=1 // pred_check_branch
      %89 = sbr.rel (0) target = $region37
    $region36: #{tpu_custom_call.1} parent=1 // pred_region
      %s91 = ssub.s32 32, 32
      %92 = vsyncadd [#allocation10], %s91
      %s93 = sshll.u32 [#allocation11], 4
      %s94 = int_to_ptr.vmem [resolvable:$true] %s93
      %99 = dma.hbm_to_vmem [thread:$0]  %s8, 32, %s94, [#allocation10], 16, 16, 1
    $region37: #{tpu_custom_call.1} parent=1 // pred_fallthru
      _
    // Predicated region
    $region38: #{tpu_custom_call.1} parent=1 // pred_check
      _
    $region39: #{tpu_custom_call.1} parent=1 // pred_check_branch
      %101 = sbr.rel (0) target = $region41
    $region40: #{tpu_custom_call.1} parent=1 // pred_region
      %s103 = ssub.s32 32, 32
      %104 = vsyncadd [#allocation13], %s103
      %s105 = sshll.u32 [#allocation12], 4
      %s106 = int_to_ptr.vmem [resolvable:$true] %s105
      %111 = dma.hbm_to_vmem [thread:$0]  %s9, 32, %s106, [#allocation13], 16, 16, 1
    $region41: #{tpu_custom_call.1} parent=1 // pred_fallthru
      _
    // Predicated region
    $region42: #{tpu_custom_call.1} parent=1 // pred_check
      _
    $region43: #{tpu_custom_call.1} parent=1 // pred_check_branch
      %113 = sbr.rel (0) target = $region45
    $region44: #{tpu_custom_call.1} parent=1 // pred_region
      %s115 = ssub.s32 512, 512
      %116 = vsyncadd [#allocation13], %s115
      %s117 = sshll.u32 [#allocation14], 4
      %s118 = int_to_ptr.vmem [resolvable:$true] %s117
      %123 = dma.hbm_to_vmem [thread:$0]  %s10, 512, %s118, [#allocation13], 64, 64, 4
    $region45: #{tpu_custom_call.1} parent=1 // pred_fallthru
      _
    // Predicated region
    $region46: #{tpu_custom_call.1} parent=1 // pred_check
      _
    $region47: #{tpu_custom_call.1} parent=1 // pred_check_branch
      %125 = sbr.rel (0) target = $region49
    $region48: #{tpu_custom_call.1} parent=1 // pred_region
      %s127 = ssub.s32 32, 32
      %128 = vsyncadd [#allocation16], %s127
      %s129 = sshll.u32 [#allocation15], 4
      %s130 = int_to_ptr.vmem [resolvable:$true] %s129
      %135 = dma.hbm_to_vmem [thread:$0]  %s11, 32, %s130, [#allocation16], 16, 16, 1
    $region49: #{tpu_custom_call.1} parent=1 // pred_fallthru
      _
    // Predicated region
    $region50: #{tpu_custom_call.1} parent=1 // pred_check
      _
    $region51: #{tpu_custom_call.1} parent=1 // pred_check_branch
      %137 = sbr.rel (0) target = $region53
    $region52: #{tpu_custom_call.1} parent=1 // pred_region
      _
    $region53: #{tpu_custom_call.1} parent=1 // pred_fallthru
      _
    // Predicated region
    $region54: #{tpu_custom_call.1} parent=1 // pred_check
      _
    $region55: #{tpu_custom_call.1} parent=1 // pred_check_branch
      %139 = sbr.rel (0) target = $region57
    $region56: #{tpu_custom_call.1} parent=1 // pred_region
      %s141 = ssub.s32 32, 32
      %142 = vsyncadd [#allocation16], %s141
      %s143 = sshll.u32 [#allocation17], 4
      %s144 = int_to_ptr.vmem [resolvable:$true] %s143
      %149 = dma.hbm_to_vmem [thread:$0]  %s13, 32, %s144, [#allocation16], 16, 16, 1
    $region57: #{tpu_custom_call.1} parent=1 // pred_fallthru
      _
    // Predicated region
    $region58: #{tpu_custom_call.1} parent=1 // pred_check
      _
    $region59: #{tpu_custom_call.1} parent=1 // pred_check_branch
      %151 = sbr.rel (0) target = $region61
    $region60: #{tpu_custom_call.1} parent=1 // pred_region
      %s153 = ssub.s32 32, 32
      %154 = vsyncadd [#allocation19], %s153
      %s155 = sshll.u32 [#allocation18], 4
      %s156 = int_to_ptr.vmem [resolvable:$true] %s155
      %161 = dma.hbm_to_vmem [thread:$0]  %s14, 32, %s156, [#allocation19], 16, 16, 1
    $region61: #{tpu_custom_call.1} parent=1 // pred_fallthru
      _
    // Predicated region
    $region62: #{tpu_custom_call.1} parent=1 // pred_check
      _
    $region63: #{tpu_custom_call.1} parent=1 // pred_check_branch
      %163 = sbr.rel (0) target = $region65
    $region64: #{tpu_custom_call.1} parent=1 // pred_region
      %s165 = ssub.s32 32, 32
      %166 = vsyncadd [#allocation19], %s165
      %s167 = sshll.u32 [#allocation20], 4
      %s168 = int_to_ptr.vmem [resolvable:$true] %s167
      %173 = dma.hbm_to_vmem [thread:$0]  %s15, 32, %s168, [#allocation19], 16, 16, 1
    $region65: #{tpu_custom_call.1} parent=1 // pred_fallthru
      _
    // Predicated region
    $region66: #{tpu_custom_call.1} parent=1 // pred_check
      _
    $region67: #{tpu_custom_call.1} parent=1 // pred_check_branch
      %175 = sbr.rel (0) target = $region69
    $region68: #{tpu_custom_call.1} parent=1 // pred_region
      _
    $region69: #{tpu_custom_call.1} parent=1 // pred_fallthru
      _
    // Predicated region
    $region70: #{tpu_custom_call.1} parent=1 // pred_check
      _
    $region71: #{tpu_custom_call.1} parent=1 // pred_check_branch
      %177 = sbr.rel (0) target = $region73
    $region72: #{tpu_custom_call.1} parent=1 // pred_region
      _
    $region73: #{tpu_custom_call.1} parent=1 // pred_fallthru
      _
    // Predicated region
    $region74: #{tpu_custom_call.1} parent=1 // pred_check
      _
    $region75: #{tpu_custom_call.1} parent=1 // pred_check_branch
      %179 = sbr.rel (0) target = $region77
    $region76: #{tpu_custom_call.1} parent=1 // pred_region
      _
    $region77: #{tpu_custom_call.1} parent=1 // pred_fallthru
      _
    // Predicated region
    $region78: #{tpu_custom_call.1} parent=1 // pred_check
      _
    $region79: #{tpu_custom_call.1} parent=1 // pred_check_branch
      %181 = sbr.rel (0) target = $region81
    $region80: #{tpu_custom_call.1} parent=1 // pred_region
      _
    $region81: #{tpu_custom_call.1} parent=1 // pred_fallthru
      _
    // Predicated region
    $region82: #{tpu_custom_call.1} parent=1 // pred_check
      _
    $region83: #{tpu_custom_call.1} parent=1 // pred_check_branch
      %183 = sbr.rel (0) target = $region85
    $region84: #{tpu_custom_call.1} parent=1 // pred_region
      _
    $region85: #{tpu_custom_call.1} parent=1 // pred_fallthru
      _
    // Predicated region
    $region86: #{tpu_custom_call.1} parent=1 // pred_check
      _
    $region87: #{tpu_custom_call.1} parent=1 // pred_check_branch
      %185 = sbr.rel (0) target = $region89
    $region88: #{tpu_custom_call.1} parent=1 // pred_region
      _
    $region89: #{tpu_custom_call.1} parent=1 // pred_fallthru
      _
    // Predicated region
    $region90: #{tpu_custom_call.1} parent=1 // pred_check
      _
    $region91: #{tpu_custom_call.1} parent=1 // pred_check_branch
      %187 = sbr.rel (0) target = $region93
    $region92: #{tpu_custom_call.1} parent=1 // pred_region
      %188 = dma.done [#allocation4], 16
    $region93: #{tpu_custom_call.1} parent=1 // pred_fallthru
      _
    // Predicated region
    $region94: #{tpu_custom_call.1} parent=1 // pred_check
      _
    $region95: #{tpu_custom_call.1} parent=1 // pred_check_branch
      %190 = sbr.rel (0) target = $region97
    $region96: #{tpu_custom_call.1} parent=1 // pred_region
      %191 = dma.done [#allocation7], 16
    $region97: #{tpu_custom_call.1} parent=1 // pred_fallthru
      _
    // Predicated region
    $region98: #{tpu_custom_call.1} parent=1 // pred_check
      _
    $region99: #{tpu_custom_call.1} parent=1 // pred_check_branch
      %193 = sbr.rel (0) target = $region101
    $region100: #{tpu_custom_call.1} parent=1 // pred_region
      %194 = dma.done [#allocation7], 32
    $region101: #{tpu_custom_call.1} parent=1 // pred_fallthru
      _
    // Predicated region
    $region102: #{tpu_custom_call.1} parent=1 // pred_check
      _
    $region103: #{tpu_custom_call.1} parent=1 // pred_check_branch
      %196 = sbr.rel (0) target = $region105
    $region104: #{tpu_custom_call.1} parent=1 // pred_region
      %197 = dma.done [#allocation10], 32
    $region105: #{tpu_custom_call.1} parent=1 // pred_fallthru
      _
    // Predicated region
    $region106: #{tpu_custom_call.1} parent=1 // pred_check
      _
    $region107: #{tpu_custom_call.1} parent=1 // pred_check_branch
      %199 = sbr.rel (0) target = $region109
    $region108: #{tpu_custom_call.1} parent=1 // pred_region
      %200 = dma.done [#allocation10], 32
    $region109: #{tpu_custom_call.1} parent=1 // pred_fallthru
      _
    // Predicated region
    $region110: #{tpu_custom_call.1} parent=1 // pred_check
      _
    $region111: #{tpu_custom_call.1} parent=1 // pred_check_branch
      %202 = sbr.rel (0) target = $region113
    $region112: #{tpu_custom_call.1} parent=1 // pred_region
      %203 = dma.done [#allocation13], 32
    $region113: #{tpu_custom_call.1} parent=1 // pred_fallthru
      _
    // Predicated region
    $region114: #{tpu_custom_call.1} parent=1 // pred_check
      _
    $region115: #{tpu_custom_call.1} parent=1 // pred_check_branch
      %205 = sbr.rel (0) target = $region117
    $region116: #{tpu_custom_call.1} parent=1 // pred_region
      %206 = dma.done [#allocation13], 512
    $region117: #{tpu_custom_call.1} parent=1 // pred_fallthru
      _
    // Predicated region
    $region118: #{tpu_custom_call.1} parent=1 // pred_check
      _
    $region119: #{tpu_custom_call.1} parent=1 // pred_check_branch
      %208 = sbr.rel (0) target = $region121
    $region120: #{tpu_custom_call.1} parent=1 // pred_region
      %209 = dma.done [#allocation16], 32
    $region121: #{tpu_custom_call.1} parent=1 // pred_fallthru
      _
    // Predicated region
    $region122: #{tpu_custom_call.1} parent=1 // pred_check
      _
    $region123: #{tpu_custom_call.1} parent=1 // pred_check_branch
      %211 = sbr.rel (0) target = $region125
    $region124: #{tpu_custom_call.1} parent=1 // pred_region
      %212 = dma.done [#allocation16], 32
    $region125: #{tpu_custom_call.1} parent=1 // pred_fallthru
      _
    // Predicated region
    $region126: #{tpu_custom_call.1} parent=1 // pred_check
      _
    $region127: #{tpu_custom_call.1} parent=1 // pred_check_branch
      %214 = sbr.rel (0) target = $region129
    $region128: #{tpu_custom_call.1} parent=1 // pred_region
      %215 = dma.done [#allocation19], 32
    $region129: #{tpu_custom_call.1} parent=1 // pred_fallthru
      _
    // Predicated region
    $region130: #{tpu_custom_call.1} parent=1 // pred_check
      _
    $region131: #{tpu_custom_call.1} parent=1 // pred_check_branch
      %217 = sbr.rel (0) target = $region133
    $region132: #{tpu_custom_call.1} parent=1 // pred_region
      %218 = dma.done [#allocation19], 32
    $region133: #{tpu_custom_call.1} parent=1 // pred_fallthru
      _
    %v220 = vld [vmem:[%s1] sm:$0xff]
    %v221 = vld [vmem:[%s1 + $0x8] sm:$0xff]
    %v222 = vld [vmem:[%s1 + $0x10] sm:$0xff]
    %v223 = vld [vmem:[%s1 + $0x18] sm:$0xff]
    %v224 = vld [vmem:[%s0] sm:$0xff]
    %v225 = vld [vmem:[%s0 + $0x8] sm:$0xff]
    %v226 = vld [vmem:[#allocation3] sm:$0x1]
    %v227 = vld [vmem:[#allocation6] sm:$0x1]
    %vm228 = vcmask 261120
    %v229 = vsel %vm228, %v224, 0.0
    %230 = vadd.xlane.f32.xlu0 %v229
    %v231 = vpop.xlane.xlu0 %230
    %v232 = vsel %vm228, %v225, 0.0
    %233 = vadd.xlane.f32.xlu0 %v232
    %v234 = vpop.xlane.xlu0 %233
    %v235 = vrcp.pop 32.0
    %v236 = vmul.f32 %v231, %v235
    %v237 = vmul.f32 %v234, %v235
    %v238 = vsub.f32 %v224, %v236
    %v239 = vsub.f32 %v225, %v237
    %v240 = vmul.f32 %v238, %v238
    %v241 = vmul.f32 %v239, %v239
    %v242 = vsel %vm228, %v240, 0.0
    %243 = vadd.xlane.f32.xlu0 %v242
    %v244 = vpop.xlane.xlu0 %243
    %v245 = vsel %vm228, %v241, 0.0
    %246 = vadd.xlane.f32.xlu0 %v245
    %v247 = vpop.xlane.xlu0 %246
    %v248 = vmul.f32 %v244, %v235
    %v249 = vmul.f32 %v247, %v235
    %v250 = vadd.f32 %v248, 1e-12
    %v251 = vadd.f32 %v249, 1e-12
    %v252 = vrsqrt.pop %v250
    %v253 = vrsqrt.pop %v251
    %v254 = vmul.f32 %v238, %v252
    %v255 = vmul.f32 %v239, %v253
    %v257 = vlaneseq
    %v258 = vshrl.u32 %v257, 7
    %v259 = vsub.s32 0, %v258
    %v260 = vrot.slane %v226, %v259
    %v262 = vmul.f32 %v254, %v260
    %v263 = vmul.f32 %v255, %v260
    %v265 = vlaneseq
    %v266 = vshrl.u32 %v265, 7
    %v267 = vsub.s32 0, %v266
    %v268 = vrot.slane %v227, %v267
    %v270 = vadd.f32 %v262, %v268
    %v271 = vadd.f32 %v263, %v268
    %v272 = vpack.c.bf16 %v271, %v270
    %v273 = vld [vmem:[%s4] sm:$0xf]
    %v274 = vld [vmem:[%s4 + $0x4] sm:$0xf]
    %v275 = vld [vmem:[%s4 + $0x8] sm:$0xf]
    %v276 = vld [vmem:[%s4 + $0xc] sm:$0xf]
    %v277 = vld [vmem:[#allocation8] sm:$0x1]
    %v279 = vlaneseq
    %v280 = vshrl.u32 %v279, 7
    %v281 = vsub.s32 0, %v280
    %v282 = vrot.slane %v277, %v281
    %v288 = vunpack.c.l.b16 %v273
    %v289 = vunpack.c.l.b16 %v274
    %v290 = vunpack.c.l.b16 %v275
    %v291 = vunpack.c.l.b16 %v276
    %v292 = vpack.c.b16 %v289, %v288
    %v293 = vpack.c.b16 %v291, %v290
    %v297 = vsel %vm228, %v272, 0
    %299 = vmatprep.subr.bf16.mxu0 0
    %300 = vmatpush1.bf16.msra.mxu0 0
    %301 = vmatprep.subr.bf16.mxu0 0
    %302 = vmatpush1.bf16.msra.mxu0 0
    %303 = vmatprep.subr.bf16.mxu0 0
    %304 = vmatpush1.bf16.msra.mxu0 0
    %305 = vmatprep.subr.bf16.mxu0 0
    %306 = vmatpush1.bf16.msra.mxu0 0
    %307 = vmatprep.subr.bf16.mxu0 0
    %308 = vmatpush1.bf16.msra.mxu0 0
    %309 = vmatprep.subr.bf16.mxu0 0
    %310 = vmatpush1.bf16.msra.mxu0 0
    %311 = vmatprep.subr.bf16.mxu0 0
    %312 = vmatpush1.bf16.msra.mxu0 %v293
    %313 = vmatprep.subr.bf16.mxu0 0
    %314 = vmatpush1.bf16.msra.mxu0 %v292
    %315 = vmatprep.subr.bf16.mxu0 0
    %316 = vmatpush2.bf16.msra.mxu0 0
    %317 = vmatprep.subr.bf16.mxu0 0
    %318 = vmatpush2.bf16.msra.mxu0 0
    %319 = vmatprep.subr.bf16.mxu0 0
    %320 = vmatpush2.bf16.msra.mxu0 0
    %321 = vmatprep.subr.bf16.mxu0 0
    %322 = vmatpush2.bf16.msra.mxu0 0
    %323 = vmatprep.subr.bf16.mxu0 0
    %324 = vmatpush2.bf16.msra.mxu0 0
    %325 = vmatprep.subr.bf16.mxu0 0
    %326 = vmatpush2.bf16.msra.mxu0 0
    %327 = vmatprep.subr.bf16.mxu0 0
    %328 = vmatpush2.bf16.msra.mxu0 0
    %329 = vmatprep.subr.bf16.mxu0 0
    %330 = vmatpush2.bf16.msra.mxu0 0
    %331 = vmatprep.mubr.bf16.mxu0 0
    %332 = vmatmul.mubr.bf16.gmra.mxu0 %v297
    %v333 = vpop.f32.mrf.mxu0
    %v334 = vadd.f32 %v282, %v333
    %v335 = vpop.f32.mrf.mxu0
    %v336 = vpop.f32.mrf.mxu0
    %v337 = vadd.f32 %v282, %v336
    %v338 = vpop.f32.mrf.mxu0
    %339 = vdwg.mxu0
    %341 = vrot.lane.b32.xlu0 %v334, 112
    %v342 = vpop.permute.xlu0 %341
    %345 = vrot.lane.b32.xlu0 %v337, 112
    %v346 = vpop.permute.xlu0 %345
    %v348 = vpack.c.bf16 %v342, %v334
    %v349 = vpack.c.bf16 %v346, %v337
    %352 = vrot.lane.b32.xlu0 %v348, 96
    %v353 = vpop.permute.xlu0 %352
    %354 = vrot.lane.b32.xlu0 %v349, 96
    %v355 = vpop.permute.xlu0 %354
    %vm356 = vcmask 130048
    %v358 = vsel %vm356, %v348, 0
    %v361 = vsel %vm356, %v349, 0
    %v364 = vsel %vm356, %v353, 0
    %v367 = vsel %vm356, %v355, 0
    %369 = vmatprep.subr.bf16.mxu0 0
    %370 = vmatpush1.bf16.xpose.msra.mxu0 0
    %371 = vmatprep.subr.bf16.mxu0 0
    %372 = vmatpush1.bf16.xpose.msra.mxu0 0
    %373 = vmatprep.subr.bf16.mxu0 0
    %374 = vmatpush1.bf16.xpose.msra.mxu0 0
    %375 = vmatprep.subr.bf16.mxu0 0
    %376 = vmatpush1.bf16.xpose.msra.mxu0 0
    %377 = vmatprep.subr.bf16.mxu0 0
    %378 = vmatpush1.bf16.xpose.msra.mxu0 0
    %379 = vmatprep.subr.bf16.mxu0 0
    %380 = vmatpush1.bf16.xpose.msra.mxu0 0
    %381 = vmatprep.subr.bf16.mxu0 0
    %382 = vmatpush1.bf16.xpose.msra.mxu0 %v367
    %383 = vmatprep.subr.bf16.mxu0 0
    %384 = vmatpush1.bf16.xpose.msra.mxu0 %v364
    %385 = vmatprep.subr.bf16.mxu0 0
    %386 = vmatpush2.bf16.xpose.msra.mxu0 0
    %387 = vmatprep.subr.bf16.mxu0 0
    %388 = vmatpush2.bf16.xpose.msra.mxu0 0
    %389 = vmatprep.subr.bf16.mxu0 0
    %390 = vmatpush2.bf16.xpose.msra.mxu0 0
    %391 = vmatprep.subr.bf16.mxu0 0
    %392 = vmatpush2.bf16.xpose.msra.mxu0 0
    %393 = vmatprep.subr.bf16.mxu0 0
    %394 = vmatpush2.bf16.xpose.msra.mxu0 0
    %395 = vmatprep.subr.bf16.mxu0 0
    %396 = vmatpush2.bf16.xpose.msra.mxu0 0
    %397 = vmatprep.subr.bf16.mxu0 0
    %398 = vmatpush2.bf16.xpose.msra.mxu0 0
    %399 = vmatprep.subr.bf16.mxu0 0
    %400 = vmatpush2.bf16.xpose.msra.mxu0 0
    %401 = vmatprep.mubr.bf16.mxu0 0
    %402 = vmatmul.mubr.bf16.gmra.mxu0 %v358
    %v403 = vpop.f32.mrf.mxu0
    %v404 = vadd.f32 0.0, %v403
    %v405 = vpop.f32.mrf.mxu0
    %v406 = vpop.f32.mrf.mxu0
    %v407 = vadd.f32 0.0, %v406
    %v408 = vpop.f32.mrf.mxu0
    %409 = vmatprep.mubr.bf16.mxu0 0
    %410 = vmatmul.mubr.bf16.gmra.mxu0 %v361
    %v411 = vpop.f32.mrf.mxu0
    %v412 = vadd.f32 0.0, %v411
    %v413 = vpop.f32.mrf.mxu0
    %v414 = vpop.f32.mrf.mxu0
    %v415 = vadd.f32 0.0, %v414
    %v416 = vpop.f32.mrf.mxu0
    %417 = vdwg.mxu0
    %v418 = vmul.f32 %v404, 0.25
    %v419 = vmul.f32 %v407, 0.25
    %v420 = vmul.f32 %v412, 0.25
    %v421 = vmul.f32 %v415, 0.25
    %v422 = vadd.f32 %v418, %v220
    %v423 = vadd.f32 %v419, %v221
    %v424 = vadd.f32 %v420, %v222
    %v425 = vadd.f32 %v421, %v223
    %v426 = vsel %vm228, %v422, -inf
    %427 = vmax.xlane.f32.xlu0 %v426
    %v428 = vpop.xlane.xlu0 %427
    %v429 = vsel %vm228, %v423, -inf
    %430 = vmax.xlane.f32.xlu0 %v429
    %v431 = vpop.xlane.xlu0 %430
    %v432 = vsel %vm228, %v424, -inf
    %433 = vmax.xlane.f32.xlu0 %v432
    %v434 = vpop.xlane.xlu0 %433
    %v435 = vsel %vm228, %v425, -inf
    %436 = vmax.xlane.f32.xlu0 %v435
    %v437 = vpop.xlane.xlu0 %436
    %v438 = vsub.f32 %v422, %v428
    %v439 = vsub.f32 %v423, %v431
    %v440 = vsub.f32 %v424, %v434
    %v441 = vsub.f32 %v425, %v437
    %v442 = vmul.f32 %v438, 1.442695
    %v443 = vpow.pop %v442
    %v444 = vmul.f32 %v439, 1.442695
    %v445 = vpow.pop %v444
    %v446 = vmul.f32 %v440, 1.442695
    %v447 = vpow.pop %v446
    %v448 = vmul.f32 %v441, 1.442695
    %v449 = vpow.pop %v448
    %v450 = vsel %vm228, %v443, 0.0
    %451 = vadd.xlane.f32.xlu0 %v450
    %v452 = vpop.xlane.xlu0 %451
    %v453 = vsel %vm228, %v445, 0.0
    %454 = vadd.xlane.f32.xlu0 %v453
    %v455 = vpop.xlane.xlu0 %454
    %v456 = vsel %vm228, %v447, 0.0
    %457 = vadd.xlane.f32.xlu0 %v456
    %v458 = vpop.xlane.xlu0 %457
    %v459 = vsel %vm228, %v449, 0.0
    %460 = vadd.xlane.f32.xlu0 %v459
    %v461 = vpop.xlane.xlu0 %460
    %v462 = vrcp.pop %v452
    %v463 = vrcp.pop %v455
    %v464 = vrcp.pop %v458
    %v465 = vrcp.pop %v461
    %v466 = vmul.f32 %v443, %v462
    %v467 = vmul.f32 %v445, %v463
    %v468 = vmul.f32 %v447, %v464
    %v469 = vmul.f32 %v449, %v465
    %v470 = vpack.c.bf16 %v467, %v466
    %v471 = vpack.c.bf16 %v469, %v468
    %472 = vrot.lane.b32.xlu0 %v348, 64
    %v473 = vpop.permute.xlu0 %472
    %474 = vrot.lane.b32.xlu0 %v349, 64
    %v475 = vpop.permute.xlu0 %474
    %v479 = vsel %vm228, %v470, 0
    %v482 = vsel %vm228, %v471, 0
    %484 = vmatprep.subr.bf16.mxu0 0
    %485 = vmatpush1.bf16.msra.mxu0 0
    %486 = vmatprep.subr.bf16.mxu0 0
    %487 = vmatpush1.bf16.msra.mxu0 0
    %488 = vmatprep.subr.bf16.mxu0 0
    %489 = vmatpush1.bf16.msra.mxu0 0
    %490 = vmatprep.subr.bf16.mxu0 0
    %491 = vmatpush1.bf16.msra.mxu0 0
    %492 = vmatprep.subr.bf16.mxu0 0
    %493 = vmatpush1.bf16.msra.mxu0 0
    %494 = vmatprep.subr.bf16.mxu0 0
    %495 = vmatpush1.bf16.msra.mxu0 0
    %496 = vmatprep.subr.bf16.mxu0 0
    %497 = vmatpush1.bf16.msra.mxu0 %v475
    %498 = vmatprep.subr.bf16.mxu0 0
    %499 = vmatpush1.bf16.msra.mxu0 %v473
    %500 = vmatprep.subr.bf16.mxu0 0
    %501 = vmatpush2.bf16.msra.mxu0 0
    %502 = vmatprep.subr.bf16.mxu0 0
    %503 = vmatpush2.bf16.msra.mxu0 0
    %504 = vmatprep.subr.bf16.mxu0 0
    %505 = vmatpush2.bf16.msra.mxu0 0
    %506 = vmatprep.subr.bf16.mxu0 0
    %507 = vmatpush2.bf16.msra.mxu0 0
    %508 = vmatprep.subr.bf16.mxu0 0
    %509 = vmatpush2.bf16.msra.mxu0 0
    %510 = vmatprep.subr.bf16.mxu0 0
    %511 = vmatpush2.bf16.msra.mxu0 0
    %512 = vmatprep.subr.bf16.mxu0 0
    %513 = vmatpush2.bf16.msra.mxu0 0
    %514 = vmatprep.subr.bf16.mxu0 0
    %515 = vmatpush2.bf16.msra.mxu0 0
    %516 = vmatprep.mubr.bf16.mxu0 0
    %517 = vmatmul.mubr.bf16.gmra.mxu0 %v479
    %v518 = vpop.f32.mrf.mxu0
    %v519 = vadd.f32 0.0, %v518
    %v520 = vpop.f32.mrf.mxu0
    %v521 = vpop.f32.mrf.mxu0
    %v522 = vadd.f32 0.0, %v521
    %v523 = vpop.f32.mrf.mxu0
    %524 = vmatprep.mubr.bf16.mxu0 0
    %525 = vmatmul.mubr.bf16.gmra.mxu0 %v482
    %v526 = vpop.f32.mrf.mxu0
    %v527 = vadd.f32 0.0, %v526
    %v528 = vpop.f32.mrf.mxu0
    %v529 = vpop.f32.mrf.mxu0
    %v530 = vadd.f32 0.0, %v529
    %v531 = vpop.f32.mrf.mxu0
    %532 = vdwg.mxu0
    %534 = vrot.lane.b32.xlu0 %v522, 16
    %v535 = vpop.permute.xlu0 %534
    %v537 = vsel %vm356, %v519, %v535
    %539 = vrot.lane.b32.xlu0 %v530, 16
    %v540 = vpop.permute.xlu0 %539
    %v542 = vsel %vm356, %v527, %v540
    %v543 = vpack.c.bf16 %v542, %v537
    %v544 = vld [vmem:[%s6] sm:$0xf]
    %v545 = vld [vmem:[%s6 + $0x4] sm:$0xf]
    %v546 = vld [vmem:[%s6 + $0x8] sm:$0xf]
    %v547 = vld [vmem:[%s6 + $0xc] sm:$0xf]
    %v548 = vld [vmem:[#allocation9] sm:$0x1]
    %v550 = vlaneseq
    %v551 = vshrl.u32 %v550, 7
    %v552 = vsub.s32 0, %v551
    %v553 = vrot.slane %v548, %v552
    %v559 = vunpack.c.l.b16 %v544
    %v560 = vunpack.c.l.b16 %v545
    %v561 = vunpack.c.l.b16 %v546
    %v562 = vunpack.c.l.b16 %v547
    %v563 = vpack.c.b16 %v560, %v559
    %v564 = vpack.c.b16 %v562, %v561
    %v568 = vsel %vm228, %v543, 0
    %570 = vmatprep.subr.bf16.mxu0 0
    %571 = vmatpush1.bf16.msra.mxu0 0
    %572 = vmatprep.subr.bf16.mxu0 0
    %573 = vmatpush1.bf16.msra.mxu0 0
    %574 = vmatprep.subr.bf16.mxu0 0
    %575 = vmatpush1.bf16.msra.mxu0 0
    %576 = vmatprep.subr.bf16.mxu0 0
    %577 = vmatpush1.bf16.msra.mxu0 0
    %578 = vmatprep.subr.bf16.mxu0 0
    %579 = vmatpush1.bf16.msra.mxu0 0
    %580 = vmatprep.subr.bf16.mxu0 0
    %581 = vmatpush1.bf16.msra.mxu0 0
    %582 = vmatprep.subr.bf16.mxu0 0
    %583 = vmatpush1.bf16.msra.mxu0 %v564
    %584 = vmatprep.subr.bf16.mxu0 0
    %585 = vmatpush1.bf16.msra.mxu0 %v563
    %586 = vmatprep.subr.bf16.mxu0 0
    %587 = vmatpush2.bf16.msra.mxu0 0
    %588 = vmatprep.subr.bf16.mxu0 0
    %589 = vmatpush2.bf16.msra.mxu0 0
    %590 = vmatprep.subr.bf16.mxu0 0
    %591 = vmatpush2.bf16.msra.mxu0 0
    %592 = vmatprep.subr.bf16.mxu0 0
    %593 = vmatpush2.bf16.msra.mxu0 0
    %594 = vmatprep.subr.bf16.mxu0 0
    %595 = vmatpush2.bf16.msra.mxu0 0
    %596 = vmatprep.subr.bf16.mxu0 0
    %597 = vmatpush2.bf16.msra.mxu0 0
    %598 = vmatprep.subr.bf16.mxu0 0
    %599 = vmatpush2.bf16.msra.mxu0 0
    %600 = vmatprep.subr.bf16.mxu0 0
    %601 = vmatpush2.bf16.msra.mxu0 0
    %602 = vmatprep.mubr.bf16.mxu0 0
    %603 = vmatmul.mubr.bf16.gmra.mxu0 %v568
    %v604 = vpop.f32.mrf.mxu0
    %v605 = vadd.f32 %v553, %v604
    %v606 = vpop.f32.mrf.mxu0
    %v607 = vpop.f32.mrf.mxu0
    %v608 = vadd.f32 %v553, %v607
    %v609 = vpop.f32.mrf.mxu0
    %610 = vdwg.mxu0
    %v611 = vadd.f32 %v605, %v270
    %v612 = vadd.f32 %v608, %v271
    %v613 = vld [vmem:[#allocation11] sm:$0x1]
    %v614 = vld [vmem:[#allocation12] sm:$0x1]
    %v615 = vsel %vm228, %v611, 0.0
    %616 = vadd.xlane.f32.xlu0 %v615
    %v617 = vpop.xlane.xlu0 %616
    %v618 = vsel %vm228, %v612, 0.0
    %619 = vadd.xlane.f32.xlu0 %v618
    %v620 = vpop.xlane.xlu0 %619
    %v621 = vmul.f32 %v617, %v235
    %v622 = vmul.f32 %v620, %v235
    %v623 = vsub.f32 %v611, %v621
    %v624 = vsub.f32 %v612, %v622
    %v625 = vmul.f32 %v623, %v623
    %v626 = vmul.f32 %v624, %v624
    %v627 = vsel %vm228, %v625, 0.0
    %628 = vadd.xlane.f32.xlu0 %v627
    %v629 = vpop.xlane.xlu0 %628
    %v630 = vsel %vm228, %v626, 0.0
    %631 = vadd.xlane.f32.xlu0 %v630
    %v632 = vpop.xlane.xlu0 %631
    %v633 = vmul.f32 %v629, %v235
    %v634 = vmul.f32 %v632, %v235
    %v635 = vadd.f32 %v633, 1e-12
    %v636 = vadd.f32 %v634, 1e-12
    %v637 = vrsqrt.pop %v635
    %v638 = vrsqrt.pop %v636
    %v639 = vmul.f32 %v623, %v637
    %v640 = vmul.f32 %v624, %v638
    %v642 = vlaneseq
    %v643 = vshrl.u32 %v642, 7
    %v644 = vsub.s32 0, %v643
    %v645 = vrot.slane %v613, %v644
    %v647 = vmul.f32 %v639, %v645
    %v648 = vmul.f32 %v640, %v645
    %v650 = vlaneseq
    %v651 = vshrl.u32 %v650, 7
    %v652 = vsub.s32 0, %v651
    %v653 = vrot.slane %v614, %v652
    %v655 = vadd.f32 %v647, %v653
    %v656 = vadd.f32 %v648, %v653
    %v657 = vpack.c.bf16 %v656, %v655
    %v658 = vld [vmem:[#allocation14] sm:$0xf]
    %v659 = vld [vmem:[#allocation14 + $0x4] sm:$0xf]
    %v660 = vld [vmem:[#allocation14 + $0x8] sm:$0xf]
    %v661 = vld [vmem:[#allocation14 + $0xc] sm:$0xf]
    %v662 = vld [vmem:[#allocation15] sm:$0x1]
    %v664 = vlaneseq
    %v665 = vshrl.u32 %v664, 7
    %v666 = vsub.s32 0, %v665
    %v667 = vrot.slane %v662, %v666
    %v673 = vunpack.c.l.b16 %v658
    %v674 = vunpack.c.l.b16 %v659
    %v675 = vunpack.c.l.b16 %v660
    %v676 = vunpack.c.l.b16 %v661
    %v677 = vpack.c.b16 %v674, %v673
    %v678 = vpack.c.b16 %v676, %v675
    %v682 = vsel %vm228, %v657, 0
    %684 = vmatprep.subr.bf16.mxu0 0
    %685 = vmatpush1.bf16.msra.mxu0 0
    %686 = vmatprep.subr.bf16.mxu0 0
    %687 = vmatpush1.bf16.msra.mxu0 0
    %688 = vmatprep.subr.bf16.mxu0 0
    %689 = vmatpush1.bf16.msra.mxu0 0
    %690 = vmatprep.subr.bf16.mxu0 0
    %691 = vmatpush1.bf16.msra.mxu0 0
    %692 = vmatprep.subr.bf16.mxu0 0
    %693 = vmatpush1.bf16.msra.mxu0 0
    %694 = vmatprep.subr.bf16.mxu0 0
    %695 = vmatpush1.bf16.msra.mxu0 0
    %696 = vmatprep.subr.bf16.mxu0 0
    %697 = vmatpush1.bf16.msra.mxu0 %v678
    %698 = vmatprep.subr.bf16.mxu0 0
    %699 = vmatpush1.bf16.msra.mxu0 %v677
    %700 = vmatprep.subr.bf16.mxu0 0
    %701 = vmatpush2.bf16.msra.mxu0 0
    %702 = vmatprep.subr.bf16.mxu0 0
    %703 = vmatpush2.bf16.msra.mxu0 0
    %704 = vmatprep.subr.bf16.mxu0 0
    %705 = vmatpush2.bf16.msra.mxu0 0
    %706 = vmatprep.subr.bf16.mxu0 0
    %707 = vmatpush2.bf16.msra.mxu0 0
    %708 = vmatprep.subr.bf16.mxu0 0
    %709 = vmatpush2.bf16.msra.mxu0 0
    %710 = vmatprep.subr.bf16.mxu0 0
    %711 = vmatpush2.bf16.msra.mxu0 0
    %712 = vmatprep.subr.bf16.mxu0 0
    %713 = vmatpush2.bf16.msra.mxu0 0
    %714 = vmatprep.subr.bf16.mxu0 0
    %715 = vmatpush2.bf16.msra.mxu0 0
    %716 = vmatprep.mubr.bf16.mxu0 0
    %717 = vmatmul.mubr.bf16.gmra.mxu0 %v682
    %v718 = vpop.f32.mrf.mxu0
    %v719 = vadd.f32 %v667, %v718
    %v720 = vpop.f32.mrf.mxu0
    %v721 = vpop.f32.mrf.mxu0
    %v722 = vadd.f32 %v667, %v721
    %v723 = vpop.f32.mrf.mxu0
    %724 = vdwg.mxu0
    %v725 = vmul.f32 %v719, 0.70710677
    %v726 = vmul.f32 %v722, 0.70710677
    %v727 = verf.f32.pop %v725
    %v728 = verf.f32.pop %v726
    %v729 = vadd.f32 %v727, 1.0
    %v730 = vadd.f32 %v728, 1.0
    %v731 = vmul.f32 %v719, %v729
    %v732 = vmul.f32 %v722, %v730
    %v733 = vpack.c.bf16 %v732, %v731
    %v734 = vld [vmem:[%s12] sm:$0xf]
    %v735 = vld [vmem:[%s12 + $0x4] sm:$0xf]
    %v736 = vld [vmem:[%s12 + $0x8] sm:$0xf]
    %v737 = vld [vmem:[%s12 + $0xc] sm:$0xf]
    %v738 = vld [vmem:[%s12 + $0x10] sm:$0xf]
    %v739 = vld [vmem:[%s12 + $0x14] sm:$0xf]
    %v740 = vld [vmem:[%s12 + $0x18] sm:$0xf]
    %v741 = vld [vmem:[%s12 + $0x1c] sm:$0xf]
    %v742 = vld [vmem:[#allocation17] sm:$0x1]
    %v744 = vlaneseq
    %v745 = vshrl.u32 %v744, 7
    %v746 = vsub.s32 0, %v745
    %v747 = vrot.slane %v742, %v746
    %v757 = vunpack.c.l.b16 %v734
    %v758 = vunpack.c.l.b16 %v735
    %v759 = vunpack.c.l.b16 %v736
    %v760 = vunpack.c.l.b16 %v737
    %v761 = vunpack.c.l.b16 %v738
    %v762 = vunpack.c.l.b16 %v739
    %v763 = vunpack.c.l.b16 %v740
    %v764 = vunpack.c.l.b16 %v741
    %v765 = vpack.c.b16 %v758, %v757
    %v766 = vpack.c.b16 %v760, %v759
    %v767 = vpack.c.b16 %v762, %v761
    %v768 = vpack.c.b16 %v764, %v763
    %vm773 = vcmask 523264
    %v775 = vsel %vm773, %v733, 0
    %777 = vmatprep.subr.bf16.mxu0 0
    %778 = vmatpush1.bf16.msra.mxu0 0
    %779 = vmatprep.subr.bf16.mxu0 0
    %780 = vmatpush1.bf16.msra.mxu0 0
    %781 = vmatprep.subr.bf16.mxu0 0
    %782 = vmatpush1.bf16.msra.mxu0 0
    %783 = vmatprep.subr.bf16.mxu0 0
    %784 = vmatpush1.bf16.msra.mxu0 0
    %785 = vmatprep.subr.bf16.mxu0 0
    %786 = vmatpush1.bf16.msra.mxu0 %v768
    %787 = vmatprep.subr.bf16.mxu0 0
    %788 = vmatpush1.bf16.msra.mxu0 %v767
    %789 = vmatprep.subr.bf16.mxu0 0
    %790 = vmatpush1.bf16.msra.mxu0 %v766
    %791 = vmatprep.subr.bf16.mxu0 0
    %792 = vmatpush1.bf16.msra.mxu0 %v765
    %793 = vmatprep.subr.bf16.mxu0 0
    %794 = vmatpush2.bf16.msra.mxu0 0
    %795 = vmatprep.subr.bf16.mxu0 0
    %796 = vmatpush2.bf16.msra.mxu0 0
    %797 = vmatprep.subr.bf16.mxu0 0
    %798 = vmatpush2.bf16.msra.mxu0 0
    %799 = vmatprep.subr.bf16.mxu0 0
    %800 = vmatpush2.bf16.msra.mxu0 0
    %801 = vmatprep.subr.bf16.mxu0 0
    %802 = vmatpush2.bf16.msra.mxu0 0
    %803 = vmatprep.subr.bf16.mxu0 0
    %804 = vmatpush2.bf16.msra.mxu0 0
    %805 = vmatprep.subr.bf16.mxu0 0
    %806 = vmatpush2.bf16.msra.mxu0 0
    %807 = vmatprep.subr.bf16.mxu0 0
    %808 = vmatpush2.bf16.msra.mxu0 0
    %809 = vmatprep.mubr.bf16.mxu0 0
    %810 = vmatmul.mubr.bf16.gmra.mxu0 %v775
    %v811 = vpop.f32.mrf.mxu0
    %v812 = vadd.f32 %v747, %v811
    %v813 = vpop.f32.mrf.mxu0
    %v814 = vpop.f32.mrf.mxu0
    %v815 = vadd.f32 %v747, %v814
    %v816 = vpop.f32.mrf.mxu0
    %817 = vdwg.mxu0
    %v818 = vadd.f32 %v812, %v655
    %v819 = vadd.f32 %v815, %v656
    %v820 = vld [vmem:[#allocation18] sm:$0x1]
    %v821 = vld [vmem:[#allocation20] sm:$0x1]
    %v822 = vsel %vm228, %v818, 0.0
    %823 = vadd.xlane.f32.xlu0 %v822
    %v824 = vpop.xlane.xlu0 %823
    %v825 = vsel %vm228, %v819, 0.0
    %826 = vadd.xlane.f32.xlu0 %v825
    %v827 = vpop.xlane.xlu0 %826
    %v828 = vmul.f32 %v824, %v235
    %v829 = vmul.f32 %v827, %v235
    %v830 = vsub.f32 %v818, %v828
    %v831 = vsub.f32 %v819, %v829
    %v832 = vmul.f32 %v830, %v830
    %v833 = vmul.f32 %v831, %v831
    %v834 = vsel %vm228, %v832, 0.0
    %835 = vadd.xlane.f32.xlu0 %v834
    %v836 = vpop.xlane.xlu0 %835
    %v837 = vsel %vm228, %v833, 0.0
    %838 = vadd.xlane.f32.xlu0 %v837
    %v839 = vpop.xlane.xlu0 %838
    %v840 = vmul.f32 %v836, %v235
    %v841 = vmul.f32 %v839, %v235
    %v842 = vadd.f32 %v840, 1e-12
    %v843 = vadd.f32 %v841, 1e-12
    %v844 = vrsqrt.pop %v842
    %v845 = vrsqrt.pop %v843
    %v846 = vmul.f32 %v830, %v844
    %v847 = vmul.f32 %v831, %v845
    %v849 = vlaneseq
    %v850 = vshrl.u32 %v849, 7
    %v851 = vsub.s32 0, %v850
    %v852 = vrot.slane %v820, %v851
    %v854 = vmul.f32 %v846, %v852
    %v855 = vmul.f32 %v847, %v852
    %v857 = vlaneseq
    %v858 = vshrl.u32 %v857, 7
    %v859 = vsub.s32 0, %v858
    %v860 = vrot.slane %v821, %v859
    %v862 = vadd.f32 %v854, %v860
    %v863 = vadd.f32 %v855, %v860
    %v864 = vpack.c.bf16 %v863, %v862
    %s865 = scalar_lea.vmem %s4, 16
    %v866 = vld [vmem:[%s865] sm:$0xf]
    %v867 = vld [vmem:[%s865 + $0x4] sm:$0xf]
    %v868 = vld [vmem:[%s865 + $0x8] sm:$0xf]
    %v869 = vld [vmem:[%s865 + $0xc] sm:$0xf]
    %s870 = scalar_lea.vmem [#allocation8], 1
    %v871 = vld [vmem:[%s870] sm:$0x1]
    %v873 = vlaneseq
    %v874 = vshrl.u32 %v873, 7
    %v875 = vsub.s32 0, %v874
    %v876 = vrot.slane %v871, %v875
    %v882 = vunpack.c.l.b16 %v866
    %v883 = vunpack.c.l.b16 %v867
    %v884 = vunpack.c.l.b16 %v868
    %v885 = vunpack.c.l.b16 %v869
    %v886 = vpack.c.b16 %v883, %v882
    %v887 = vpack.c.b16 %v885, %v884
    %v891 = vsel %vm228, %v864, 0
    %893 = vmatprep.subr.bf16.mxu0 0
    %894 = vmatpush1.bf16.msra.mxu0 0
    %895 = vmatprep.subr.bf16.mxu0 0
    %896 = vmatpush1.bf16.msra.mxu0 0
    %897 = vmatprep.subr.bf16.mxu0 0
    %898 = vmatpush1.bf16.msra.mxu0 0
    %899 = vmatprep.subr.bf16.mxu0 0
    %900 = vmatpush1.bf16.msra.mxu0 0
    %901 = vmatprep.subr.bf16.mxu0 0
    %902 = vmatpush1.bf16.msra.mxu0 0
    %903 = vmatprep.subr.bf16.mxu0 0
    %904 = vmatpush1.bf16.msra.mxu0 0
    %905 = vmatprep.subr.bf16.mxu0 0
    %906 = vmatpush1.bf16.msra.mxu0 %v887
    %907 = vmatprep.subr.bf16.mxu0 0
    %908 = vmatpush1.bf16.msra.mxu0 %v886
    %909 = vmatprep.subr.bf16.mxu0 0
    %910 = vmatpush2.bf16.msra.mxu0 0
    %911 = vmatprep.subr.bf16.mxu0 0
    %912 = vmatpush2.bf16.msra.mxu0 0
    %913 = vmatprep.subr.bf16.mxu0 0
    %914 = vmatpush2.bf16.msra.mxu0 0
    %915 = vmatprep.subr.bf16.mxu0 0
    %916 = vmatpush2.bf16.msra.mxu0 0
    %917 = vmatprep.subr.bf16.mxu0 0
    %918 = vmatpush2.bf16.msra.mxu0 0
    %919 = vmatprep.subr.bf16.mxu0 0
    %920 = vmatpush2.bf16.msra.mxu0 0
    %921 = vmatprep.subr.bf16.mxu0 0
    %922 = vmatpush2.bf16.msra.mxu0 0
    %923 = vmatprep.subr.bf16.mxu0 0
    %924 = vmatpush2.bf16.msra.mxu0 0
    %925 = vmatprep.mubr.bf16.mxu0 0
    %926 = vmatmul.mubr.bf16.gmra.mxu0 %v891
    %v927 = vpop.f32.mrf.mxu0
    %v928 = vadd.f32 %v876, %v927
    %v929 = vpop.f32.mrf.mxu0
    %v930 = vpop.f32.mrf.mxu0
    %v931 = vadd.f32 %v876, %v930
    %v932 = vpop.f32.mrf.mxu0
    %933 = vdwg.mxu0
    %935 = vrot.lane.b32.xlu0 %v928, 112
    %v936 = vpop.permute.xlu0 %935
    %939 = vrot.lane.b32.xlu0 %v931, 112
    %v940 = vpop.permute.xlu0 %939
    %v942 = vpack.c.bf16 %v936, %v928
    %v943 = vpack.c.bf16 %v940, %v931
    %946 = vrot.lane.b32.xlu0 %v942, 96
    %v947 = vpop.permute.xlu0 %946
    %948 = vrot.lane.b32.xlu0 %v943, 96
    %v949 = vpop.permute.xlu0 %948
    %v951 = vsel %vm356, %v942, 0
    %v954 = vsel %vm356, %v943, 0
    %v957 = vsel %vm356, %v947, 0
    %v960 = vsel %vm356, %v949, 0
    %962 = vmatprep.subr.bf16.mxu0 0
    %963 = vmatpush1.bf16.xpose.msra.mxu0 0
    %964 = vmatprep.subr.bf16.mxu0 0
    %965 = vmatpush1.bf16.xpose.msra.mxu0 0
    %966 = vmatprep.subr.bf16.mxu0 0
    %967 = vmatpush1.bf16.xpose.msra.mxu0 0
    %968 = vmatprep.subr.bf16.mxu0 0
    %969 = vmatpush1.bf16.xpose.msra.mxu0 0
    %970 = vmatprep.subr.bf16.mxu0 0
    %971 = vmatpush1.bf16.xpose.msra.mxu0 0
    %972 = vmatprep.subr.bf16.mxu0 0
    %973 = vmatpush1.bf16.xpose.msra.mxu0 0
    %974 = vmatprep.subr.bf16.mxu0 0
    %975 = vmatpush1.bf16.xpose.msra.mxu0 %v960
    %976 = vmatprep.subr.bf16.mxu0 0
    %977 = vmatpush1.bf16.xpose.msra.mxu0 %v957
    %978 = vmatprep.subr.bf16.mxu0 0
    %979 = vmatpush2.bf16.xpose.msra.mxu0 0
    %980 = vmatprep.subr.bf16.mxu0 0
    %981 = vmatpush2.bf16.xpose.msra.mxu0 0
    %982 = vmatprep.subr.bf16.mxu0 0
    %983 = vmatpush2.bf16.xpose.msra.mxu0 0
    %984 = vmatprep.subr.bf16.mxu0 0
    %985 = vmatpush2.bf16.xpose.msra.mxu0 0
    %986 = vmatprep.subr.bf16.mxu0 0
    %987 = vmatpush2.bf16.xpose.msra.mxu0 0
    %988 = vmatprep.subr.bf16.mxu0 0
    %989 = vmatpush2.bf16.xpose.msra.mxu0 0
    %990 = vmatprep.subr.bf16.mxu0 0
    %991 = vmatpush2.bf16.xpose.msra.mxu0 0
    %992 = vmatprep.subr.bf16.mxu0 0
    %993 = vmatpush2.bf16.xpose.msra.mxu0 0
    %994 = vmatprep.mubr.bf16.mxu0 0
    %995 = vmatmul.mubr.bf16.gmra.mxu0 %v951
    %v996 = vpop.f32.mrf.mxu0
    %v997 = vadd.f32 0.0, %v996
    %v998 = vpop.f32.mrf.mxu0
    %v999 = vpop.f32.mrf.mxu0
    %v1000 = vadd.f32 0.0, %v999
    %v1001 = vpop.f32.mrf.mxu0
    %1002 = vmatprep.mubr.bf16.mxu0 0
    %1003 = vmatmul.mubr.bf16.gmra.mxu0 %v954
    %v1004 = vpop.f32.mrf.mxu0
    %v1005 = vadd.f32 0.0, %v1004
    %v1006 = vpop.f32.mrf.mxu0
    %v1007 = vpop.f32.mrf.mxu0
    %v1008 = vadd.f32 0.0, %v1007
    %v1009 = vpop.f32.mrf.mxu0
    %1010 = vdwg.mxu0
    %v1011 = vmul.f32 %v997, 0.25
    %v1012 = vmul.f32 %v1000, 0.25
    %v1013 = vmul.f32 %v1005, 0.25
    %v1014 = vmul.f32 %v1008, 0.25
    %v1015 = vadd.f32 %v1011, %v220
    %v1016 = vadd.f32 %v1012, %v221
    %v1017 = vadd.f32 %v1013, %v222
    %v1018 = vadd.f32 %v1014, %v223
    %v1019 = vsel %vm228, %v1015, -inf
    %1020 = vmax.xlane.f32.xlu0 %v1019
    %v1021 = vpop.xlane.xlu0 %1020
    %v1022 = vsel %vm228, %v1016, -inf
    %1023 = vmax.xlane.f32.xlu0 %v1022
    %v1024 = vpop.xlane.xlu0 %1023
    %v1025 = vsel %vm228, %v1017, -inf
    %1026 = vmax.xlane.f32.xlu0 %v1025
    %v1027 = vpop.xlane.xlu0 %1026
    %v1028 = vsel %vm228, %v1018, -inf
    %1029 = vmax.xlane.f32.xlu0 %v1028
    %v1030 = vpop.xlane.xlu0 %1029
    %v1031 = vsub.f32 %v1015, %v1021
    %v1032 = vsub.f32 %v1016, %v1024
    %v1033 = vsub.f32 %v1017, %v1027
    %v1034 = vsub.f32 %v1018, %v1030
    %v1035 = vmul.f32 %v1031, 1.442695
    %v1036 = vpow.pop %v1035
    %v1037 = vmul.f32 %v1032, 1.442695
    %v1038 = vpow.pop %v1037
    %v1039 = vmul.f32 %v1033, 1.442695
    %v1040 = vpow.pop %v1039
    %v1041 = vmul.f32 %v1034, 1.442695
    %v1042 = vpow.pop %v1041
    %v1043 = vsel %vm228, %v1036, 0.0
    %1044 = vadd.xlane.f32.xlu0 %v1043
    %v1045 = vpop.xlane.xlu0 %1044
    %v1046 = vsel %vm228, %v1038, 0.0
    %1047 = vadd.xlane.f32.xlu0 %v1046
    %v1048 = vpop.xlane.xlu0 %1047
    %v1049 = vsel %vm228, %v1040, 0.0
    %1050 = vadd.xlane.f32.xlu0 %v1049
    %v1051 = vpop.xlane.xlu0 %1050
    %v1052 = vsel %vm228, %v1042, 0.0
    %1053 = vadd.xlane.f32.xlu0 %v1052
    %v1054 = vpop.xlane.xlu0 %1053
    %v1055 = vrcp.pop %v1045
    %v1056 = vrcp.pop %v1048
    %v1057 = vrcp.pop %v1051
    %v1058 = vrcp.pop %v1054
    %v1059 = vmul.f32 %v1036, %v1055
    %v1060 = vmul.f32 %v1038, %v1056
    %v1061 = vmul.f32 %v1040, %v1057
    %v1062 = vmul.f32 %v1042, %v1058
    %v1063 = vpack.c.bf16 %v1060, %v1059
    %v1064 = vpack.c.bf16 %v1062, %v1061
    %1065 = vrot.lane.b32.xlu0 %v942, 64
    %v1066 = vpop.permute.xlu0 %1065
    %1067 = vrot.lane.b32.xlu0 %v943, 64
    %v1068 = vpop.permute.xlu0 %1067
    %v1072 = vsel %vm228, %v1063, 0
    %v1075 = vsel %vm228, %v1064, 0
    %1077 = vmatprep.subr.bf16.mxu0 0
    %1078 = vmatpush1.bf16.msra.mxu0 0
    %1079 = vmatprep.subr.bf16.mxu0 0
    %1080 = vmatpush1.bf16.msra.mxu0 0
    %1081 = vmatprep.subr.bf16.mxu0 0
    %1082 = vmatpush1.bf16.msra.mxu0 0
    %1083 = vmatprep.subr.bf16.mxu0 0
    %1084 = vmatpush1.bf16.msra.mxu0 0
    %1085 = vmatprep.subr.bf16.mxu0 0
    %1086 = vmatpush1.bf16.msra.mxu0 0
    %1087 = vmatprep.subr.bf16.mxu0 0
    %1088 = vmatpush1.bf16.msra.mxu0 0
    %1089 = vmatprep.subr.bf16.mxu0 0
    %1090 = vmatpush1.bf16.msra.mxu0 %v1068
    %1091 = vmatprep.subr.bf16.mxu0 0
    %1092 = vmatpush1.bf16.msra.mxu0 %v1066
    %1093 = vmatprep.subr.bf16.mxu0 0
    %1094 = vmatpush2.bf16.msra.mxu0 0
    %1095 = vmatprep.subr.bf16.mxu0 0
    %1096 = vmatpush2.bf16.msra.mxu0 0
    %1097 = vmatprep.subr.bf16.mxu0 0
    %1098 = vmatpush2.bf16.msra.mxu0 0
    %1099 = vmatprep.subr.bf16.mxu0 0
    %1100 = vmatpush2.bf16.msra.mxu0 0
    %1101 = vmatprep.subr.bf16.mxu0 0
    %1102 = vmatpush2.bf16.msra.mxu0 0
    %1103 = vmatprep.subr.bf16.mxu0 0
    %1104 = vmatpush2.bf16.msra.mxu0 0
    %1105 = vmatprep.subr.bf16.mxu0 0
    %1106 = vmatpush2.bf16.msra.mxu0 0
    %1107 = vmatprep.subr.bf16.mxu0 0
    %1108 = vmatpush2.bf16.msra.mxu0 0
    %1109 = vmatprep.mubr.bf16.mxu0 0
    %1110 = vmatmul.mubr.bf16.gmra.mxu0 %v1072
    %v1111 = vpop.f32.mrf.mxu0
    %v1112 = vadd.f32 0.0, %v1111
    %v1113 = vpop.f32.mrf.mxu0
    %v1114 = vpop.f32.mrf.mxu0
    %v1115 = vadd.f32 0.0, %v1114
    %v1116 = vpop.f32.mrf.mxu0
    %1117 = vmatprep.mubr.bf16.mxu0 0
    %1118 = vmatmul.mubr.bf16.gmra.mxu0 %v1075
    %v1119 = vpop.f32.mrf.mxu0
    %v1120 = vadd.f32 0.0, %v1119
    %v1121 = vpop.f32.mrf.mxu0
    %v1122 = vpop.f32.mrf.mxu0
    %v1123 = vadd.f32 0.0, %v1122
    %v1124 = vpop.f32.mrf.mxu0
    %1125 = vdwg.mxu0
    %1127 = vrot.lane.b32.xlu0 %v1115, 16
    %v1128 = vpop.permute.xlu0 %1127
    %v1130 = vsel %vm356, %v1112, %v1128
    %1132 = vrot.lane.b32.xlu0 %v1123, 16
    %v1133 = vpop.permute.xlu0 %1132
    %v1135 = vsel %vm356, %v1120, %v1133
    %v1136 = vpack.c.bf16 %v1135, %v1130
    %s1137 = scalar_lea.vmem %s6, 16
    %v1138 = vld [vmem:[%s1137] sm:$0xf]
    %v1139 = vld [vmem:[%s1137 + $0x4] sm:$0xf]
    %v1140 = vld [vmem:[%s1137 + $0x8] sm:$0xf]
    %v1141 = vld [vmem:[%s1137 + $0xc] sm:$0xf]
    %s1142 = scalar_lea.vmem [#allocation9], 1
    %v1143 = vld [vmem:[%s1142] sm:$0x1]
    %v1145 = vlaneseq
    %v1146 = vshrl.u32 %v1145, 7
    %v1147 = vsub.s32 0, %v1146
    %v1148 = vrot.slane %v1143, %v1147
    %v1154 = vunpack.c.l.b16 %v1138
    %v1155 = vunpack.c.l.b16 %v1139
    %v1156 = vunpack.c.l.b16 %v1140
    %v1157 = vunpack.c.l.b16 %v1141
    %v1158 = vpack.c.b16 %v1155, %v1154
    %v1159 = vpack.c.b16 %v1157, %v1156
    %v1163 = vsel %vm228, %v1136, 0
    %1165 = vmatprep.subr.bf16.mxu0 0
    %1166 = vmatpush1.bf16.msra.mxu0 0
    %1167 = vmatprep.subr.bf16.mxu0 0
    %1168 = vmatpush1.bf16.msra.mxu0 0
    %1169 = vmatprep.subr.bf16.mxu0 0
    %1170 = vmatpush1.bf16.msra.mxu0 0
    %1171 = vmatprep.subr.bf16.mxu0 0
    %1172 = vmatpush1.bf16.msra.mxu0 0
    %1173 = vmatprep.subr.bf16.mxu0 0
    %1174 = vmatpush1.bf16.msra.mxu0 0
    %1175 = vmatprep.subr.bf16.mxu0 0
    %1176 = vmatpush1.bf16.msra.mxu0 0
    %1177 = vmatprep.subr.bf16.mxu0 0
    %1178 = vmatpush1.bf16.msra.mxu0 %v1159
    %1179 = vmatprep.subr.bf16.mxu0 0
    %1180 = vmatpush1.bf16.msra.mxu0 %v1158
    %1181 = vmatprep.subr.bf16.mxu0 0
    %1182 = vmatpush2.bf16.msra.mxu0 0
    %1183 = vmatprep.subr.bf16.mxu0 0
    %1184 = vmatpush2.bf16.msra.mxu0 0
    %1185 = vmatprep.subr.bf16.mxu0 0
    %1186 = vmatpush2.bf16.msra.mxu0 0
    %1187 = vmatprep.subr.bf16.mxu0 0
    %1188 = vmatpush2.bf16.msra.mxu0 0
    %1189 = vmatprep.subr.bf16.mxu0 0
    %1190 = vmatpush2.bf16.msra.mxu0 0
    %1191 = vmatprep.subr.bf16.mxu0 0
    %1192 = vmatpush2.bf16.msra.mxu0 0
    %1193 = vmatprep.subr.bf16.mxu0 0
    %1194 = vmatpush2.bf16.msra.mxu0 0
    %1195 = vmatprep.subr.bf16.mxu0 0
    %1196 = vmatpush2.bf16.msra.mxu0 0
    %1197 = vmatprep.mubr.bf16.mxu0 0
    %1198 = vmatmul.mubr.bf16.gmra.mxu0 %v1163
    %v1199 = vpop.f32.mrf.mxu0
    %v1200 = vadd.f32 %v1148, %v1199
    %v1201 = vpop.f32.mrf.mxu0
    %v1202 = vpop.f32.mrf.mxu0
    %v1203 = vadd.f32 %v1148, %v1202
    %v1204 = vpop.f32.mrf.mxu0
    %1205 = vdwg.mxu0
    %v1206 = vadd.f32 %v1200, %v862
    %v1207 = vadd.f32 %v1203, %v863
    %s1208 = scalar_lea.vmem [#allocation11], 1
    %v1209 = vld [vmem:[%s1208] sm:$0x1]
    %s1210 = scalar_lea.vmem [#allocation12], 1
    %v1211 = vld [vmem:[%s1210] sm:$0x1]
    %v1212 = vsel %vm228, %v1206, 0.0
    %1213 = vadd.xlane.f32.xlu0 %v1212
    %v1214 = vpop.xlane.xlu0 %1213
    %v1215 = vsel %vm228, %v1207, 0.0
    %1216 = vadd.xlane.f32.xlu0 %v1215
    %v1217 = vpop.xlane.xlu0 %1216
    %v1218 = vmul.f32 %v1214, %v235
    %v1219 = vmul.f32 %v1217, %v235
    %v1220 = vsub.f32 %v1206, %v1218
    %v1221 = vsub.f32 %v1207, %v1219
    %v1222 = vmul.f32 %v1220, %v1220
    %v1223 = vmul.f32 %v1221, %v1221
    %v1224 = vsel %vm228, %v1222, 0.0
    %1225 = vadd.xlane.f32.xlu0 %v1224
    %v1226 = vpop.xlane.xlu0 %1225
    %v1227 = vsel %vm228, %v1223, 0.0
    %1228 = vadd.xlane.f32.xlu0 %v1227
    %v1229 = vpop.xlane.xlu0 %1228
    %v1230 = vmul.f32 %v1226, %v235
    %v1231 = vmul.f32 %v1229, %v235
    %v1232 = vadd.f32 %v1230, 1e-12
    %v1233 = vadd.f32 %v1231, 1e-12
    %v1234 = vrsqrt.pop %v1232
    %v1235 = vrsqrt.pop %v1233
    %v1236 = vmul.f32 %v1220, %v1234
    %v1237 = vmul.f32 %v1221, %v1235
    %v1239 = vlaneseq
    %v1240 = vshrl.u32 %v1239, 7
    %v1241 = vsub.s32 0, %v1240
    %v1242 = vrot.slane %v1209, %v1241
    %v1244 = vmul.f32 %v1236, %v1242
    %v1245 = vmul.f32 %v1237, %v1242
    %v1247 = vlaneseq
    %v1248 = vshrl.u32 %v1247, 7
    %v1249 = vsub.s32 0, %v1248
    %v1250 = vrot.slane %v1211, %v1249
    %v1252 = vadd.f32 %v1244, %v1250
    %v1253 = vadd.f32 %v1245, %v1250
    %v1254 = vpack.c.bf16 %v1253, %v1252
    %s1255 = scalar_lea.vmem [#allocation14], 16
    %v1256 = vld [vmem:[%s1255] sm:$0xf]
    %v1257 = vld [vmem:[%s1255 + $0x4] sm:$0xf]
    %v1258 = vld [vmem:[%s1255 + $0x8] sm:$0xf]
    %v1259 = vld [vmem:[%s1255 + $0xc] sm:$0xf]
    %s1260 = scalar_lea.vmem [#allocation15], 1
    %v1261 = vld [vmem:[%s1260] sm:$0x1]
    %v1263 = vlaneseq
    %v1264 = vshrl.u32 %v1263, 7
    %v1265 = vsub.s32 0, %v1264
    %v1266 = vrot.slane %v1261, %v1265
    %v1272 = vunpack.c.l.b16 %v1256
    %v1273 = vunpack.c.l.b16 %v1257
    %v1274 = vunpack.c.l.b16 %v1258
    %v1275 = vunpack.c.l.b16 %v1259
    %v1276 = vpack.c.b16 %v1273, %v1272
    %v1277 = vpack.c.b16 %v1275, %v1274
    %v1281 = vsel %vm228, %v1254, 0
    %1283 = vmatprep.subr.bf16.mxu0 0
    %1284 = vmatpush1.bf16.msra.mxu0 0
    %1285 = vmatprep.subr.bf16.mxu0 0
    %1286 = vmatpush1.bf16.msra.mxu0 0
    %1287 = vmatprep.subr.bf16.mxu0 0
    %1288 = vmatpush1.bf16.msra.mxu0 0
    %1289 = vmatprep.subr.bf16.mxu0 0
    %1290 = vmatpush1.bf16.msra.mxu0 0
    %1291 = vmatprep.subr.bf16.mxu0 0
    %1292 = vmatpush1.bf16.msra.mxu0 0
    %1293 = vmatprep.subr.bf16.mxu0 0
    %1294 = vmatpush1.bf16.msra.mxu0 0
    %1295 = vmatprep.subr.bf16.mxu0 0
    %1296 = vmatpush1.bf16.msra.mxu0 %v1277
    %1297 = vmatprep.subr.bf16.mxu0 0
    %1298 = vmatpush1.bf16.msra.mxu0 %v1276
    %1299 = vmatprep.subr.bf16.mxu0 0
    %1300 = vmatpush2.bf16.msra.mxu0 0
    %1301 = vmatprep.subr.bf16.mxu0 0
    %1302 = vmatpush2.bf16.msra.mxu0 0
    %1303 = vmatprep.subr.bf16.mxu0 0
    %1304 = vmatpush2.bf16.msra.mxu0 0
    %1305 = vmatprep.subr.bf16.mxu0 0
    %1306 = vmatpush2.bf16.msra.mxu0 0
    %1307 = vmatprep.subr.bf16.mxu0 0
    %1308 = vmatpush2.bf16.msra.mxu0 0
    %1309 = vmatprep.subr.bf16.mxu0 0
    %1310 = vmatpush2.bf16.msra.mxu0 0
    %1311 = vmatprep.subr.bf16.mxu0 0
    %1312 = vmatpush2.bf16.msra.mxu0 0
    %1313 = vmatprep.subr.bf16.mxu0 0
    %1314 = vmatpush2.bf16.msra.mxu0 0
    %1315 = vmatprep.mubr.bf16.mxu0 0
    %1316 = vmatmul.mubr.bf16.gmra.mxu0 %v1281
    %v1317 = vpop.f32.mrf.mxu0
    %v1318 = vadd.f32 %v1266, %v1317
    %v1319 = vpop.f32.mrf.mxu0
    %v1320 = vpop.f32.mrf.mxu0
    %v1321 = vadd.f32 %v1266, %v1320
    %v1322 = vpop.f32.mrf.mxu0
    %1323 = vdwg.mxu0
    %v1324 = vmul.f32 %v1318, 0.70710677
    %v1325 = vmul.f32 %v1321, 0.70710677
    %v1326 = verf.f32.pop %v1324
    %v1327 = verf.f32.pop %v1325
    %v1328 = vadd.f32 %v1326, 1.0
    %v1329 = vadd.f32 %v1327, 1.0
    %v1330 = vmul.f32 %v1318, %v1328
    %v1331 = vmul.f32 %v1321, %v1329
    %v1332 = vpack.c.bf16 %v1331, %v1330
    %s1333 = scalar_lea.vmem %s12, 32
    %v1334 = vld [vmem:[%s1333] sm:$0xf]
    %v1335 = vld [vmem:[%s1333 + $0x4] sm:$0xf]
    %v1336 = vld [vmem:[%s1333 + $0x8] sm:$0xf]
    %v1337 = vld [vmem:[%s1333 + $0xc] sm:$0xf]
    %v1338 = vld [vmem:[%s1333 + $0x10] sm:$0xf]
    %v1339 = vld [vmem:[%s1333 + $0x14] sm:$0xf]
    %v1340 = vld [vmem:[%s1333 + $0x18] sm:$0xf]
    %v1341 = vld [vmem:[%s1333 + $0x1c] sm:$0xf]
    %s1342 = scalar_lea.vmem [#allocation17], 1
    %v1343 = vld [vmem:[%s1342] sm:$0x1]
    %v1345 = vlaneseq
    %v1346 = vshrl.u32 %v1345, 7
    %v1347 = vsub.s32 0, %v1346
    %v1348 = vrot.slane %v1343, %v1347
    %v1358 = vunpack.c.l.b16 %v1334
    %v1359 = vunpack.c.l.b16 %v1335
    %v1360 = vunpack.c.l.b16 %v1336
    %v1361 = vunpack.c.l.b16 %v1337
    %v1362 = vunpack.c.l.b16 %v1338
    %v1363 = vunpack.c.l.b16 %v1339
    %v1364 = vunpack.c.l.b16 %v1340
    %v1365 = vunpack.c.l.b16 %v1341
    %v1366 = vpack.c.b16 %v1359, %v1358
    %v1367 = vpack.c.b16 %v1361, %v1360
    %v1368 = vpack.c.b16 %v1363, %v1362
    %v1369 = vpack.c.b16 %v1365, %v1364
    %v1375 = vsel %vm773, %v1332, 0
    %1377 = vmatprep.subr.bf16.mxu0 0
    %1378 = vmatpush1.bf16.msra.mxu0 0
    %1379 = vmatprep.subr.bf16.mxu0 0
    %1380 = vmatpush1.bf16.msra.mxu0 0
    %1381 = vmatprep.subr.bf16.mxu0 0
    %1382 = vmatpush1.bf16.msra.mxu0 0
    %1383 = vmatprep.subr.bf16.mxu0 0
    %1384 = vmatpush1.bf16.msra.mxu0 0
    %1385 = vmatprep.subr.bf16.mxu0 0
    %1386 = vmatpush1.bf16.msra.mxu0 %v1369
    %1387 = vmatprep.subr.bf16.mxu0 0
    %1388 = vmatpush1.bf16.msra.mxu0 %v1368
    %1389 = vmatprep.subr.bf16.mxu0 0
    %1390 = vmatpush1.bf16.msra.mxu0 %v1367
    %1391 = vmatprep.subr.bf16.mxu0 0
    %1392 = vmatpush1.bf16.msra.mxu0 %v1366
    %1393 = vmatprep.subr.bf16.mxu0 0
    %1394 = vmatpush2.bf16.msra.mxu0 0
    %1395 = vmatprep.subr.bf16.mxu0 0
    %1396 = vmatpush2.bf16.msra.mxu0 0
    %1397 = vmatprep.subr.bf16.mxu0 0
    %1398 = vmatpush2.bf16.msra.mxu0 0
    %1399 = vmatprep.subr.bf16.mxu0 0
    %1400 = vmatpush2.bf16.msra.mxu0 0
    %1401 = vmatprep.subr.bf16.mxu0 0
    %1402 = vmatpush2.bf16.msra.mxu0 0
    %1403 = vmatprep.subr.bf16.mxu0 0
    %1404 = vmatpush2.bf16.msra.mxu0 0
    %1405 = vmatprep.subr.bf16.mxu0 0
    %1406 = vmatpush2.bf16.msra.mxu0 0
    %1407 = vmatprep.subr.bf16.mxu0 0
    %1408 = vmatpush2.bf16.msra.mxu0 0
    %1409 = vmatprep.mubr.bf16.mxu0 0
    %1410 = vmatmul.mubr.bf16.gmra.mxu0 %v1375
    %v1411 = vpop.f32.mrf.mxu0
    %v1412 = vadd.f32 %v1348, %v1411
    %v1413 = vpop.f32.mrf.mxu0
    %v1414 = vpop.f32.mrf.mxu0
    %v1415 = vadd.f32 %v1348, %v1414
    %v1416 = vpop.f32.mrf.mxu0
    %1417 = vdwg.mxu0
    %v1418 = vadd.f32 %v1412, %v1252
    %v1419 = vadd.f32 %v1415, %v1253
    %s1420 = scalar_lea.vmem [#allocation18], 1
    %v1421 = vld [vmem:[%s1420] sm:$0x1]
    %s1422 = scalar_lea.vmem [#allocation20], 1
    %v1423 = vld [vmem:[%s1422] sm:$0x1]
    %v1424 = vsel %vm228, %v1418, 0.0
    %1425 = vadd.xlane.f32.xlu0 %v1424
    %v1426 = vpop.xlane.xlu0 %1425
    %v1427 = vsel %vm228, %v1419, 0.0
    %1428 = vadd.xlane.f32.xlu0 %v1427
    %v1429 = vpop.xlane.xlu0 %1428
    %v1430 = vmul.f32 %v1426, %v235
    %v1431 = vmul.f32 %v1429, %v235
    %v1432 = vsub.f32 %v1418, %v1430
    %v1433 = vsub.f32 %v1419, %v1431
    %v1434 = vmul.f32 %v1432, %v1432
    %v1435 = vmul.f32 %v1433, %v1433
    %v1436 = vsel %vm228, %v1434, 0.0
    %1437 = vadd.xlane.f32.xlu0 %v1436
    %v1438 = vpop.xlane.xlu0 %1437
    %v1439 = vsel %vm228, %v1435, 0.0
    %1440 = vadd.xlane.f32.xlu0 %v1439
    %v1441 = vpop.xlane.xlu0 %1440
    %v1442 = vmul.f32 %v1438, %v235
    %v1443 = vmul.f32 %v1441, %v235
    %v1444 = vadd.f32 %v1442, 1e-12
    %v1445 = vadd.f32 %v1443, 1e-12
    %v1446 = vrsqrt.pop %v1444
    %v1447 = vrsqrt.pop %v1445
    %v1448 = vmul.f32 %v1432, %v1446
    %v1449 = vmul.f32 %v1433, %v1447
    %v1451 = vlaneseq
    %v1452 = vshrl.u32 %v1451, 7
    %v1453 = vsub.s32 0, %v1452
    %v1454 = vrot.slane %v1421, %v1453
    %v1456 = vmul.f32 %v1448, %v1454
    %v1457 = vmul.f32 %v1449, %v1454
    %v1459 = vlaneseq
    %v1460 = vshrl.u32 %v1459, 7
    %v1461 = vsub.s32 0, %v1460
    %v1462 = vrot.slane %v1423, %v1461
    %v1464 = vadd.f32 %v1456, %v1462
    %v1465 = vadd.f32 %v1457, %v1462
    %v1466 = vpack.c.bf16 %v1465, %v1464
    %v1467 = vld [vmem:[%s16] sm:$0xf]
    %v1468 = vld [vmem:[%s16 + $0x4] sm:$0xf]
    %v1469 = vld [vmem:[%s16 + $0x8] sm:$0xf]
    %v1470 = vld [vmem:[%s16 + $0xc] sm:$0xf]
    %v1471 = vld [vmem:[%s17] sm:$0x1]
    %v1473 = vlaneseq
    %v1474 = vshrl.u32 %v1473, 7
    %v1475 = vsub.s32 0, %v1474
    %v1476 = vrot.slane %v1471, %v1475
    %v1482 = vunpack.c.l.b16 %v1467
    %v1483 = vunpack.c.l.b16 %v1468
    %v1484 = vunpack.c.l.b16 %v1469
    %v1485 = vunpack.c.l.b16 %v1470
    %v1486 = vpack.c.b16 %v1483, %v1482
    %v1487 = vpack.c.b16 %v1485, %v1484
    %v1491 = vsel %vm228, %v1466, 0
    %1493 = vmatprep.subr.bf16.mxu0 0
    %1494 = vmatpush1.bf16.msra.mxu0 0
    %1495 = vmatprep.subr.bf16.mxu0 0
    %1496 = vmatpush1.bf16.msra.mxu0 0
    %1497 = vmatprep.subr.bf16.mxu0 0
    %1498 = vmatpush1.bf16.msra.mxu0 0
    %1499 = vmatprep.subr.bf16.mxu0 0
    %1500 = vmatpush1.bf16.msra.mxu0 0
    %1501 = vmatprep.subr.bf16.mxu0 0
    %1502 = vmatpush1.bf16.msra.mxu0 0
    %1503 = vmatprep.subr.bf16.mxu0 0
    %1504 = vmatpush1.bf16.msra.mxu0 0
    %1505 = vmatprep.subr.bf16.mxu0 0
    %1506 = vmatpush1.bf16.msra.mxu0 %v1487
    %1507 = vmatprep.subr.bf16.mxu0 0
    %1508 = vmatpush1.bf16.msra.mxu0 %v1486
    %1509 = vmatprep.subr.bf16.mxu0 0
    %1510 = vmatpush2.bf16.msra.mxu0 0
    %1511 = vmatprep.subr.bf16.mxu0 0
    %1512 = vmatpush2.bf16.msra.mxu0 0
    %1513 = vmatprep.subr.bf16.mxu0 0
    %1514 = vmatpush2.bf16.msra.mxu0 0
    %1515 = vmatprep.subr.bf16.mxu0 0
    %1516 = vmatpush2.bf16.msra.mxu0 0
    %1517 = vmatprep.subr.bf16.mxu0 0
    %1518 = vmatpush2.bf16.msra.mxu0 0
    %1519 = vmatprep.subr.bf16.mxu0 0
    %1520 = vmatpush2.bf16.msra.mxu0 0
    %1521 = vmatprep.subr.bf16.mxu0 0
    %1522 = vmatpush2.bf16.msra.mxu0 0
    %1523 = vmatprep.subr.bf16.mxu0 0
    %1524 = vmatpush2.bf16.msra.mxu0 0
    %1525 = vmatprep.mubr.bf16.mxu0 0
    %1526 = vmatmul.mubr.bf16.gmra.mxu0 %v1491
    %v1527 = vpop.f32.mrf.mxu0
    %v1528 = vadd.f32 %v1476, %v1527
    %v1529 = vpop.f32.mrf.mxu0
    %v1530 = vpop.f32.mrf.mxu0
    %v1531 = vadd.f32 %v1476, %v1530
    %v1532 = vpop.f32.mrf.mxu0
    %1533 = vdwg.mxu0
    %v1534 = vtanh.pop %v1528
    %v1535 = vtanh.pop %v1531
    %v1536 = vpack.c.bf16 %v1535, %v1534
    %v1537 = vld [vmem:[%s18] sm:$0xf]
    %v1538 = vld [vmem:[%s18 + $0x4] sm:$0xf]
    %v1539 = vld [vmem:[%s18 + $0x8] sm:$0xf]
    %v1540 = vld [vmem:[%s18 + $0xc] sm:$0xf]
    %v1541 = vld [vmem:[#allocation2] sm:$0x1]
    %v1543 = vlaneseq
    %v1544 = vshrl.u32 %v1543, 7
    %v1545 = vsub.s32 0, %v1544
    %v1546 = vrot.slane %v1541, %v1545
    %v1552 = vunpack.c.l.b16 %v1537
    %v1553 = vunpack.c.l.b16 %v1538
    %v1554 = vunpack.c.l.b16 %v1539
    %v1555 = vunpack.c.l.b16 %v1540
    %v1556 = vpack.c.b16 %v1553, %v1552
    %v1557 = vpack.c.b16 %v1555, %v1554
    %v1561 = vsel %vm228, %v1536, 0
    %1563 = vmatprep.subr.bf16.mxu0 0
    %1564 = vmatpush1.bf16.msra.mxu0 0
    %1565 = vmatprep.subr.bf16.mxu0 0
    %1566 = vmatpush1.bf16.msra.mxu0 0
    %1567 = vmatprep.subr.bf16.mxu0 0
    %1568 = vmatpush1.bf16.msra.mxu0 0
    %1569 = vmatprep.subr.bf16.mxu0 0
    %1570 = vmatpush1.bf16.msra.mxu0 0
    %1571 = vmatprep.subr.bf16.mxu0 0
    %1572 = vmatpush1.bf16.msra.mxu0 0
    %1573 = vmatprep.subr.bf16.mxu0 0
    %1574 = vmatpush1.bf16.msra.mxu0 0
    %1575 = vmatprep.subr.bf16.mxu0 0
    %1576 = vmatpush1.bf16.msra.mxu0 %v1557
    %1577 = vmatprep.subr.bf16.mxu0 0
    %1578 = vmatpush1.bf16.msra.mxu0 %v1556
    %1579 = vmatprep.subr.bf16.mxu0 0
    %1580 = vmatpush2.bf16.msra.mxu0 0
    %1581 = vmatprep.subr.bf16.mxu0 0
    %1582 = vmatpush2.bf16.msra.mxu0 0
    %1583 = vmatprep.subr.bf16.mxu0 0
    %1584 = vmatpush2.bf16.msra.mxu0 0
    %1585 = vmatprep.subr.bf16.mxu0 0
    %1586 = vmatpush2.bf16.msra.mxu0 0
    %1587 = vmatprep.subr.bf16.mxu0 0
    %1588 = vmatpush2.bf16.msra.mxu0 0
    %1589 = vmatprep.subr.bf16.mxu0 0
    %1590 = vmatpush2.bf16.msra.mxu0 0
    %1591 = vmatprep.subr.bf16.mxu0 0
    %1592 = vmatpush2.bf16.msra.mxu0 0
    %1593 = vmatprep.subr.bf16.mxu0 0
    %1594 = vmatpush2.bf16.msra.mxu0 0
    %1595 = vmatprep.mubr.bf16.mxu0 0
    %1596 = vmatmul.mubr.bf16.gmra.mxu0 %v1561
    %v1597 = vpop.f32.mrf.mxu0
    %v1598 = vadd.f32 %v1546, %v1597
    %v1599 = vpop.f32.mrf.mxu0
    %v1600 = vpop.f32.mrf.mxu0
    %v1601 = vadd.f32 %v1546, %v1600
    %v1602 = vpop.f32.mrf.mxu0
    %1603 = vdwg.mxu0
    %v1604 = vlaneseq
    %v1605 = vshrl.u32 %v1604, 7
    %vm1606 = vcmask 7168
    %v1607 = vsel %vm1606, %v1598, -inf
    %v1608 = vrot.slane %v1607, 4
    %v1609 = vmax.f32 %v1607, %v1608
    %v1610 = vrot.slane %v1609, 2
    %v1611 = vmax.f32 %v1609, %v1610
    %v1612 = vrot.slane %v1611, 1
    %v1613 = vmax.f32 %v1611, %v1612
    %v1614 = vsub.f32 %v1598, %v1613
    %v1615 = vmul.f32 %v1614, 1.442695
    %v1616 = vpow.pop %v1615
    %v1617 = vsel %vm1606, %v1616, 0.0
    %v1618 = vrot.slane %v1617, 4
    %v1619 = vadd.f32 %v1617, %v1618
    %v1620 = vrot.slane %v1619, 2
    %v1621 = vadd.f32 %v1619, %v1620
    %v1622 = vrot.slane %v1621, 1
    %v1623 = vadd.f32 %v1621, %v1622
    %v1624 = vrcp.pop %v1623
    %v1625 = vmul.f32 %v1616, %v1624
    %v1626 = vpack.c.bf16 %v1625, %v1625
    %v1627 = vpack.c.bf16 %v1464, %v1464
    %1628 = vxpose.xlu0.c.b16.start [1/8] %v1626, 128
    %1629 = vxpose.xlu0.c.b16.cont [2/8] 0, 128
    %1630 = vxpose.xlu0.c.b16.cont [3/8] 0, 128
    %1631 = vxpose.xlu0.c.b16.cont [4/8] 0, 128
    %1632 = vxpose.xlu0.c.b16.cont [5/8] 0, 128
    %1633 = vxpose.xlu0.c.b16.cont [6/8] 0, 128
    %1634 = vxpose.xlu0.c.b16.cont [7/8] 0, 128
    %1635 = vxpose.xlu0.c.b16.end [8/8] 0, 128
    %v1636 = vpop.trf.xlu0
    %v1637 = vpop.trf.xlu0
    %v1638 = vpop.trf.xlu0
    %v1639 = vpop.trf.xlu0
    %v1640 = vpop.trf.xlu0
    %v1641 = vpop.trf.xlu0
    %v1642 = vpop.trf.xlu0
    %v1643 = vpop.trf.xlu0
    %vm1644 = vcmask 64512
    %v1646 = vsel %vm1644, %v1636, 0
    %vm1648 = vcmask 1043456
    %v1650 = vsel %vm1648, %v1627, 0
    %1652 = vmatprep.subr.bf16.mxu0 0
    %1653 = vmatpush1.bf16.msra.mxu0 0
    %1654 = vmatprep.subr.bf16.mxu0 0
    %1655 = vmatpush1.bf16.msra.mxu0 0
    %1656 = vmatprep.subr.bf16.mxu0 0
    %1657 = vmatpush1.bf16.msra.mxu0 0
    %1658 = vmatprep.subr.bf16.mxu0 0
    %1659 = vmatpush1.bf16.msra.mxu0 0
    %1660 = vmatprep.subr.bf16.mxu0 0
    %1661 = vmatpush1.bf16.msra.mxu0 0
    %1662 = vmatprep.subr.bf16.mxu0 0
    %1663 = vmatpush1.bf16.msra.mxu0 0
    %1664 = vmatprep.subr.bf16.mxu0 0
    %1665 = vmatpush1.bf16.msra.mxu0 0
    %1666 = vmatprep.subr.bf16.mxu0 0
    %1667 = vmatpush1.bf16.msra.mxu0 %v1650
    %1668 = vmatprep.subr.bf16.mxu0 0
    %1669 = vmatpush2.bf16.msra.mxu0 0
    %1670 = vmatprep.subr.bf16.mxu0 0
    %1671 = vmatpush2.bf16.msra.mxu0 0
    %1672 = vmatprep.subr.bf16.mxu0 0
    %1673 = vmatpush2.bf16.msra.mxu0 0
    %1674 = vmatprep.subr.bf16.mxu0 0
    %1675 = vmatpush2.bf16.msra.mxu0 0
    %1676 = vmatprep.subr.bf16.mxu0 0
    %1677 = vmatpush2.bf16.msra.mxu0 0
    %1678 = vmatprep.subr.bf16.mxu0 0
    %1679 = vmatpush2.bf16.msra.mxu0 0
    %1680 = vmatprep.subr.bf16.mxu0 0
    %1681 = vmatpush2.bf16.msra.mxu0 0
    %1682 = vmatprep.subr.bf16.mxu0 0
    %1683 = vmatpush2.bf16.msra.mxu0 0
    %1684 = vmatprep.mubr.bf16.mxu0 0
    %1685 = vmatmul.mubr.bf16.gmra.mxu0 %v1646
    %v1686 = vpop.f32.mrf.mxu0
    %v1687 = vadd.f32 0.0, %v1686
    %v1688 = vpop.f32.mrf.mxu0
    %v1689 = vpop.f32.mrf.mxu0
    %v1690 = vpop.f32.mrf.mxu0
    %1691 = vdwg.mxu0
    %vm1692 = vcmp.eq.s32.totalorder %v1605, 0
    %v1693 = vsel %vm1692, 1, 0
    %vm1694 = vcmp.eq.s32.totalorder %v1693, 1
    %v1695 = vlaneseq
    %v1696 = vshrl.u32 %v1695, 7
    %v1697 = vsub.s32 0, %v1696
    %v1698 = vrot.slane %v1687, %v1697
    %v1699 = vsel %vm1694, %v1698, 0.0
    %v1700 = vadd.f32 %v1699, 0.0
    %v1701 = vsel %vm1606, %v1601, -inf
    %v1702 = vrot.slane %v1701, 4
    %v1703 = vmax.f32 %v1701, %v1702
    %v1704 = vrot.slane %v1703, 2
    %v1705 = vmax.f32 %v1703, %v1704
    %v1706 = vrot.slane %v1705, 1
    %v1707 = vmax.f32 %v1705, %v1706
    %v1708 = vsub.f32 %v1601, %v1707
    %v1709 = vmul.f32 %v1708, 1.442695
    %v1710 = vpow.pop %v1709
    %v1711 = vsel %vm1606, %v1710, 0.0
    %v1712 = vrot.slane %v1711, 4
    %v1713 = vadd.f32 %v1711, %v1712
    %v1714 = vrot.slane %v1713, 2
    %v1715 = vadd.f32 %v1713, %v1714
    %v1716 = vrot.slane %v1715, 1
    %v1717 = vadd.f32 %v1715, %v1716
    %v1718 = vrcp.pop %v1717
    %v1719 = vmul.f32 %v1710, %v1718
    %v1720 = vpack.c.bf16 %v1719, %v1719
    %v1721 = vpack.c.bf16 %v1465, %v1465
    %1722 = vxpose.xlu0.c.b16.start [1/8] %v1720, 128
    %1723 = vxpose.xlu0.c.b16.cont [2/8] 0, 128
    %1724 = vxpose.xlu0.c.b16.cont [3/8] 0, 128
    %1725 = vxpose.xlu0.c.b16.cont [4/8] 0, 128
    %1726 = vxpose.xlu0.c.b16.cont [5/8] 0, 128
    %1727 = vxpose.xlu0.c.b16.cont [6/8] 0, 128
    %1728 = vxpose.xlu0.c.b16.cont [7/8] 0, 128
    %1729 = vxpose.xlu0.c.b16.end [8/8] 0, 128
    %v1730 = vpop.trf.xlu0
    %v1731 = vpop.trf.xlu0
    %v1732 = vpop.trf.xlu0
    %v1733 = vpop.trf.xlu0
    %v1734 = vpop.trf.xlu0
    %v1735 = vpop.trf.xlu0
    %v1736 = vpop.trf.xlu0
    %v1737 = vpop.trf.xlu0
    %v1739 = vsel %vm1644, %v1730, 0
    %v1742 = vsel %vm1648, %v1721, 0
    %1744 = vmatprep.subr.bf16.mxu0 0
    %1745 = vmatpush1.bf16.msra.mxu0 0
    %1746 = vmatprep.subr.bf16.mxu0 0
    %1747 = vmatpush1.bf16.msra.mxu0 0
    %1748 = vmatprep.subr.bf16.mxu0 0
    %1749 = vmatpush1.bf16.msra.mxu0 0
    %1750 = vmatprep.subr.bf16.mxu0 0
    %1751 = vmatpush1.bf16.msra.mxu0 0
    %1752 = vmatprep.subr.bf16.mxu0 0
    %1753 = vmatpush1.bf16.msra.mxu0 0
    %1754 = vmatprep.subr.bf16.mxu0 0
    %1755 = vmatpush1.bf16.msra.mxu0 0
    %1756 = vmatprep.subr.bf16.mxu0 0
    %1757 = vmatpush1.bf16.msra.mxu0 0
    %1758 = vmatprep.subr.bf16.mxu0 0
    %1759 = vmatpush1.bf16.msra.mxu0 %v1742
    %1760 = vmatprep.subr.bf16.mxu0 0
    %1761 = vmatpush2.bf16.msra.mxu0 0
    %1762 = vmatprep.subr.bf16.mxu0 0
    %1763 = vmatpush2.bf16.msra.mxu0 0
    %1764 = vmatprep.subr.bf16.mxu0 0
    %1765 = vmatpush2.bf16.msra.mxu0 0
    %1766 = vmatprep.subr.bf16.mxu0 0
    %1767 = vmatpush2.bf16.msra.mxu0 0
    %1768 = vmatprep.subr.bf16.mxu0 0
    %1769 = vmatpush2.bf16.msra.mxu0 0
    %1770 = vmatprep.subr.bf16.mxu0 0
    %1771 = vmatpush2.bf16.msra.mxu0 0
    %1772 = vmatprep.subr.bf16.mxu0 0
    %1773 = vmatpush2.bf16.msra.mxu0 0
    %1774 = vmatprep.subr.bf16.mxu0 0
    %1775 = vmatpush2.bf16.msra.mxu0 0
    %1776 = vmatprep.mubr.bf16.mxu0 0
    %1777 = vmatmul.mubr.bf16.gmra.mxu0 %v1739
    %v1778 = vpop.f32.mrf.mxu0
    %v1779 = vadd.f32 0.0, %v1778
    %v1780 = vpop.f32.mrf.mxu0
    %v1781 = vpop.f32.mrf.mxu0
    %v1782 = vpop.f32.mrf.mxu0
    %1783 = vdwg.mxu0
    %vm1784 = vcmp.eq.s32.totalorder %v1605, 1
    %v1785 = vsel %vm1784, 1, 0
    %vm1786 = vcmp.eq.s32.totalorder %v1785, 1
    %v1787 = vlaneseq
    %v1788 = vshrl.u32 %v1787, 7
    %v1789 = vsub.s32 0, %v1788
    %v1790 = vrot.slane %v1779, %v1789
    %v1791 = vsel %vm1786, %v1790, 0.0
    %v1792 = vadd.f32 %v1700, %v1791
    %v1793 = vpack.c.bf16 %v1792, %v1792
    %v1794 = vld [vmem:[%s20] sm:$0xf]
    %v1795 = vld [vmem:[%s20 + $0x4] sm:$0xf]
    %v1796 = vld [vmem:[%s20 + $0x8] sm:$0xf]
    %v1797 = vld [vmem:[%s20 + $0xc] sm:$0xf]
    %v1798 = vld [vmem:[%s21] sm:$0x1]
    %v1800 = vlaneseq
    %v1801 = vshrl.u32 %v1800, 7
    %v1802 = vsub.s32 0, %v1801
    %v1803 = vrot.slane %v1798, %v1802
    %v1809 = vunpack.c.l.b16 %v1794
    %v1810 = vunpack.c.l.b16 %v1795
    %v1811 = vunpack.c.l.b16 %v1796
    %v1812 = vunpack.c.l.b16 %v1797
    %v1813 = vpack.c.b16 %v1810, %v1809
    %v1814 = vpack.c.b16 %v1812, %v1811
    %v1818 = vsel %vm228, %v1793, 0
    %1820 = vmatprep.subr.bf16.mxu0 0
    %1821 = vmatpush1.bf16.msra.mxu0 0
    %1822 = vmatprep.subr.bf16.mxu0 0
    %1823 = vmatpush1.bf16.msra.mxu0 0
    %1824 = vmatprep.subr.bf16.mxu0 0
    %1825 = vmatpush1.bf16.msra.mxu0 0
    %1826 = vmatprep.subr.bf16.mxu0 0
    %1827 = vmatpush1.bf16.msra.mxu0 0
    %1828 = vmatprep.subr.bf16.mxu0 0
    %1829 = vmatpush1.bf16.msra.mxu0 0
    %1830 = vmatprep.subr.bf16.mxu0 0
    %1831 = vmatpush1.bf16.msra.mxu0 0
    %1832 = vmatprep.subr.bf16.mxu0 0
    %1833 = vmatpush1.bf16.msra.mxu0 %v1814
    %1834 = vmatprep.subr.bf16.mxu0 0
    %1835 = vmatpush1.bf16.msra.mxu0 %v1813
    %1836 = vmatprep.subr.bf16.mxu0 0
    %1837 = vmatpush2.bf16.msra.mxu0 0
    %1838 = vmatprep.subr.bf16.mxu0 0
    %1839 = vmatpush2.bf16.msra.mxu0 0
    %1840 = vmatprep.subr.bf16.mxu0 0
    %1841 = vmatpush2.bf16.msra.mxu0 0
    %1842 = vmatprep.subr.bf16.mxu0 0
    %1843 = vmatpush2.bf16.msra.mxu0 0
    %1844 = vmatprep.subr.bf16.mxu0 0
    %1845 = vmatpush2.bf16.msra.mxu0 0
    %1846 = vmatprep.subr.bf16.mxu0 0
    %1847 = vmatpush2.bf16.msra.mxu0 0
    %1848 = vmatprep.subr.bf16.mxu0 0
    %1849 = vmatpush2.bf16.msra.mxu0 0
    %1850 = vmatprep.subr.bf16.mxu0 0
    %1851 = vmatpush2.bf16.msra.mxu0 0
    %1852 = vmatprep.mubr.bf16.mxu0 0
    %1853 = vmatmul.mubr.bf16.gmra.mxu0 %v1818
    %v1854 = vpop.f32.mrf.mxu0
    %v1855 = vadd.f32 %v1803, %v1854
    %v1856 = vpop.f32.mrf.mxu0
    %v1857 = vpop.f32.mrf.mxu0
    %v1858 = vpop.f32.mrf.mxu0
    %1859 = vdwg.mxu0
    %vm1860 = vcmask 9216
    %1861 = vst.msk [vmem:[#allocation21] sm:$0x3] %vm1860, %v1855
    // Predicated region
    $region134: #{tpu_custom_call.1} parent=1 // pred_check
      _
    $region135: #{tpu_custom_call.1} parent=1 // pred_check_branch
      %1863 = sbr.rel (0) target = $region137
    $region136: #{tpu_custom_call.1} parent=1 // pred_region
      %s1865 = ssub.s32 32, 32
      %1866 = vsyncadd [#allocation5], %s1865
      %s1868 = sshll.u32 [#allocation21], 4
      %s1869 = int_to_ptr.vmem [resolvable:$true] %s1868
      %1871 = dma.vmem_to_hbm [thread:$0]  %s1869, 32, %s22, [#allocation5]
    $region137: #{tpu_custom_call.1} parent=1 // pred_fallthru
      _
    // Predicated region
    $region138: #{tpu_custom_call.1} parent=1 // pred_check
      _
    $region139: #{tpu_custom_call.1} parent=1 // pred_check_branch
      %1873 = sbr.rel (0) target = $region141
    $region140: #{tpu_custom_call.1} parent=1 // pred_region
      %1874 = dma.done [#allocation5], 32
    $region141: #{tpu_custom_call.1} parent=1 // pred_fallthru
      _
    %1875 = vsyncpa [#allocation4], 1
    %1876 = vsyncpa [#allocation7], 1
    %1877 = vsyncpa [#allocation10], 1
    %1878 = vsyncpa [#allocation13], 1
    %1879 = vsyncpa [#allocation16], 1
    %1880 = vsyncpa [#allocation19], 1
    %1881 = vsyncpa [#allocation5], 1

</llo_original>
